<compile_context>
chip_gen: v6e
topology: v6e:2x2x1
jax: 0.10.0
libtpu: 0.0.40
codegen_flags: <defaults>
</compile_context>

<pallas_src>
import functools

import numpy as np
import jax
import jax.numpy as jnp
from jax.experimental import pallas as pl
from jax.experimental.pallas import tpu as pltpu


# ----------------------------- Pallas kernel ------------------------------- #
def _dwconv1d_kernel(x_ref, w_ref, b_ref, o_ref, *, pad_l, pad_r, acc_dtype):
    """One grid step: depthwise conv1d on a (bblk, cblk, T) block.

    x_ref : (bblk, cblk, T)      input block (time on lanes, channels on sublanes)
    w_ref : (cblk, K)            per-channel taps   (grid-invariant along batch)
    b_ref : (cblk, 1)            per-channel bias
    o_ref : (bblk, cblk, T_out)  output block
    """
    bblk, cblk, T = x_ref.shape
    T_out = o_ref.shape[2]
    K = w_ref.shape[1]

    x = x_ref[...].astype(acc_dtype)                      # accumulate in f32
    b = b_ref[...].astype(acc_dtype)[None, :, :]          # (1, cblk, 1)
    w = w_ref[...].astype(acc_dtype)                      # (cblk, K)
    # Per-tap weights split once, as (1, cblk, 1) lane-splat operands.
    w_taps = [w[:, k:k + 1][None, :, :] for k in range(K)]

    # ---- bulk: tap k needs xpad[t + k] == x[t + (k - pad_l)].  The shift is an
    # XLU lane rotation that co-issues with the VPU MACs; the rotation wraps at
    # the block edges, which only corrupts the first pad_l / last pad_r output
    # columns -- those are recomputed exactly below.
    def shifted(k):
        s = k - pad_l
        return x if s == 0 else pltpu.roll(x, shift=(-s) % T, axis=2)

    acc = shifted(0) * w_taps[0]
    for k in range(1, K):                                 # K small & static
        acc = acc + shifted(k) * w_taps[k]
    o_ref[...] = (acc[:, :, 0:T_out] + b).astype(o_ref.dtype)

    # ---- left edge fixup: output columns [0, pad_l) see the left zero pad ----
    if pad_l > 0:
        lbuf = jnp.concatenate(            # = xpad[0 : pad_l + K - 1]
            [jnp.zeros((bblk, cblk, pad_l), acc_dtype), x[:, :, 0:K - 1]],
            axis=2)
        lfix = lbuf[:, :, 0:pad_l] * w_taps[0]
        for k in range(1, K):
            lfix = lfix + lbuf[:, :, k:k + pad_l] * w_taps[k]
        o_ref[:, :, 0:pad_l] = (lfix + b).astype(o_ref.dtype)

    # ---- right edge fixup: output columns [T_out - pad_r, T_out) ----
    if pad_r > 0:
        rbuf = jnp.concatenate(            # = xpad[T_out - pad_r : T_out + K - 1]
            [x[:, :, T - (K - 1):T],
             jnp.zeros((bblk, cblk, pad_r), acc_dtype)],
            axis=2)
        rfix = rbuf[:, :, 0:pad_r] * w_taps[0]
        for k in range(1, K):
            rfix = rfix + rbuf[:, :, k:k + pad_r] * w_taps[k]
        o_ref[:, :, T_out - pad_r:T_out] = (rfix + b).astype(o_ref.dtype)


# ------------------------------- wrapper ----------------------------------- #
def _choose_blocks(B, C, T, T_out, in_itemsize):
    """Largest (batch, channel) tiles that fit a conservative VMEM budget.

    Budget covers the double-buffered input/output blocks (BlockSpec pipelining)
    plus a few full-size float32 temporaries inside the kernel (upcast x,
    rotated tap, accumulator).  ~20 MiB keeps the kernel safe on v7x (64 MiB
    physical VMEM, 32 MiB default scoped) as well as on v5e/v6e, where bigger
    blocks with fewer grid steps track the HBM roofline best.
    """
    budget = 20 * 1024 * 1024

    def vmem_cost(bb, cb):
        io = 2 * bb * cb * (T + T_out) * in_itemsize      # pipelined HBM<->VMEM
        tmp = 4 * bb * cb * T * 4                         # in-kernel f32 temps
        return io + tmp

    c_cands = []
    for c in (C, 2048, 1024, 512, 256, 128, 64, 32, 16, 8):
        if 0 < c <= C and C % c == 0 and c not in c_cands:
            c_cands.append(c)                             # full-C or multiple of 8
    cblk = c_cands[-1]
    for c in c_cands:                                     # largest channel tile first
        if vmem_cost(1, c) <= budget:
            cblk = c
            break
    bblk = 1
    for bb in range(B, 0, -1):                            # then grow the batch tile
        if B % bb == 0 and vmem_cost(bb, cblk) <= budget:
            bblk = bb
            break
    # Single-TC chips (v5e/v6e) want the coarsest grid that fits VMEM; on v7x
    # the channel axis usually still yields >=2 parallel steps for real
    # Conformer widths so both TensorCores get work.
    return bblk, cblk


def depthwise_conv1d(x, weight, bias, padding):
    """Depthwise Conv1d, equivalent to PyTorch DepthWiseConv1d.forward.

    x: (B, C_in, T); weight: (C_out, 1, K); bias: (C_out,); padding: (l, r).
    """
    pad_l, pad_r = int(padding[0]), int(padding[1])
    B, C_in, T = x.shape
    C_out, _, K = weight.shape

    # groups == C_in: output channel co reads input channel co // (C_out//C_in).
    mult = C_out // C_in
    if mult > 1:
        # TODO(synk): replace with a channel-block index_map (input block =
        # output block // mult) so the repeated input is never materialized in
        # HBM; the standard Conformer config (chan_in == chan_out) never takes
        # this path.
        x = jnp.repeat(x, mult, axis=1)
    C = C_out

    T_pad = T + pad_l + pad_r
    T_out = T_pad - K + 1
    if T_out < 1:
        raise ValueError("Convolution output length would be < 1.")

    # Pathological shapes (T < K, or padding wider than K-1) fall back to
    # materializing the zero padding once in HBM; the Conformer "same" case
    # (T >= K, pad_l + pad_r == K - 1) never takes this path.
    if T < K or T_out > T:
        x = jnp.pad(x, ((0, 0), (0, 0), (pad_l, pad_r)))
        pad_l = pad_r = 0
        T = T_pad

    w2d = weight[:, 0, :]                                 # (C, K)
    b2d = bias[:, None]                                   # (C, 1)

    bblk, cblk = _choose_blocks(B, C, T, T_out, x.dtype.itemsize)
    kernel = functools.partial(
        _dwconv1d_kernel, pad_l=pad_l, pad_r=pad_r, acc_dtype=jnp.float32)

    # TODO(synk): add a haloed time-axis grid (tile = 128*n - (K-1)) for very
    # long sequences that do not fit the per-block VMEM budget.
    return pl.pallas_call(
        kernel,
        out_shape=jax.ShapeDtypeStruct((B, C, T_out), x.dtype),
        grid=(B // bblk, C // cblk),
        in_specs=[
            pl.BlockSpec((bblk, cblk, T), lambda i, j: (i, j, 0)),
            pl.BlockSpec((cblk, K), lambda i, j: (j, 0)),    # grid-invariant taps
            pl.BlockSpec((cblk, 1), lambda i, j: (j, 0)),    # grid-invariant bias
        ],
        out_specs=pl.BlockSpec((bblk, cblk, T_out), lambda i, j: (i, j, 0)),
        compiler_params=pltpu.CompilerParams(
            dimension_semantics=("parallel", "parallel"),
            vmem_limit_bytes=32 * 1024 * 1024),
    )(x, w2d, b2d)


# --------------------------- pure-JAX reference ----------------------------- #
def reference(x, weight, bias, padding):
    pad_l, pad_r = padding
    out = jax.lax.conv_general_dilated(
        x, weight,
        window_strides=(1,),
        padding=[(pad_l, pad_r)],
        dimension_numbers=('NCH', 'OIH', 'NCH'),
        feature_group_count=x.shape[1],
        precision=jax.lax.Precision.HIGHEST)
    return out + bias[None, :, None]


if __name__ == "__main__":
    key = jax.random.PRNGKey(0)
    # chan_in == chan_out (typical Conformer usage), "same" padding for K=7.
    B, C, T, K = 2, 64, 128, 7
    padding = (K // 2, K // 2 - (K + 1) % 2)              # -> (3, 3), T_out = 128

    kx, kw, kb = jax.random.split(key, 3)
    x = jax.random.normal(kx, (B, C, T), jnp.float32)
    weight = jax.random.normal(kw, (C, 1, K), jnp.float32) * 0.2
    bias = jax.random.normal(kb, (C,), jnp.float32) * 0.1

    # float32, symmetric "same" padding.
    out = jax.block_until_ready(depthwise_conv1d(x, weight, bias, padding))
    ref = reference(x, weight, bias, padding)
    np.testing.assert_allclose(np.asarray(out), np.asarray(ref),
                               atol=1e-4, rtol=1e-4)

    # Asymmetric padding: exercises the left-edge fixup and the T_out < T path.
    out2 = jax.block_until_ready(depthwise_conv1d(x, weight, bias, (2, 0)))
    ref2 = reference(x, weight, bias, (2, 0))
    np.testing.assert_allclose(np.asarray(out2), np.asarray(ref2),
                               atol=1e-4, rtol=1e-4)

    # bf16 I/O (kernel still accumulates in float32): halves HBM traffic.
    out_bf = jax.block_until_ready(
        depthwise_conv1d(x.astype(jnp.bfloat16), weight.astype(jnp.bfloat16),
                         bias.astype(jnp.bfloat16), padding))
    assert out_bf.dtype == jnp.bfloat16 and out_bf.shape == ref.shape
    np.testing.assert_allclose(np.asarray(out_bf, dtype=np.float32),
                               np.asarray(ref), atol=0.1, rtol=0.1)

    print("KERNEL_OK")
</pallas_src>

<mosaic_0001>
module attributes {stable_mosaic.version = 11 : i64} {
  func.func @_dwconv1d_kernel(%arg0: i32, %arg1: i32, %arg2: memref<2x64x128xf32, #tpu.memory_space<vmem>>, %arg3: memref<64x7xf32, #tpu.memory_space<vmem>>, %arg4: memref<64x1xf32, #tpu.memory_space<vmem>>, %arg5: memref<2x64x128xf32, #tpu.memory_space<vmem>>) attributes {dimension_semantics = [#tpu.dimension_semantics<parallel>, #tpu.dimension_semantics<parallel>], iteration_bounds = array<i64: 1, 1>, scalar_prefetch = 0 : i64, scratch_operands = 0 : i64, tpu.core_type = #tpu.core_type<tc>, window_params = [{transform_indices = @transform_0, window_bounds = array<i64: 2, 64, 128>}, {transform_indices = @transform_1, window_bounds = array<i64: 64, 7>}, {transform_indices = @transform_2, window_bounds = array<i64: 64, 1>}, {transform_indices = @transform_3, window_bounds = array<i64: 2, 64, 128>}]} {
    %c0 = arith.constant 0 : index
    %c0_0 = arith.constant 0 : index
    %c0_1 = arith.constant 0 : index
    %0 = vector.load %arg2[%c0, %c0_0, %c0_1] : memref<2x64x128xf32, #tpu.memory_space<vmem>>, vector<2x64x128xf32>
    %c0_2 = arith.constant 0 : index
    %c0_3 = arith.constant 0 : index
    %1 = vector.load %arg4[%c0_2, %c0_3] : memref<64x1xf32, #tpu.memory_space<vmem>>, vector<64x1xf32>
    %2 = vector.shape_cast %1 : vector<64x1xf32> to vector<1x64x1xf32>
    %c0_4 = arith.constant 0 : index
    %c0_5 = arith.constant 0 : index
    %3 = vector.load %arg3[%c0_4, %c0_5] : memref<64x7xf32, #tpu.memory_space<vmem>>, vector<64x7xf32>
    %4 = vector.extract_strided_slice %3 {offsets = [0, 0], sizes = [64, 1], strides = [1, 1]} : vector<64x7xf32> to vector<64x1xf32>
    %5 = vector.shape_cast %4 : vector<64x1xf32> to vector<1x64x1xf32>
    %6 = vector.extract_strided_slice %3 {offsets = [0, 1], sizes = [64, 1], strides = [1, 1]} : vector<64x7xf32> to vector<64x1xf32>
    %7 = vector.shape_cast %6 : vector<64x1xf32> to vector<1x64x1xf32>
    %8 = vector.extract_strided_slice %3 {offsets = [0, 2], sizes = [64, 1], strides = [1, 1]} : vector<64x7xf32> to vector<64x1xf32>
    %9 = vector.shape_cast %8 : vector<64x1xf32> to vector<1x64x1xf32>
    %10 = vector.extract_strided_slice %3 {offsets = [0, 3], sizes = [64, 1], strides = [1, 1]} : vector<64x7xf32> to vector<64x1xf32>
    %11 = vector.shape_cast %10 : vector<64x1xf32> to vector<1x64x1xf32>
    %12 = vector.extract_strided_slice %3 {offsets = [0, 4], sizes = [64, 1], strides = [1, 1]} : vector<64x7xf32> to vector<64x1xf32>
    %13 = vector.shape_cast %12 : vector<64x1xf32> to vector<1x64x1xf32>
    %14 = vector.extract_strided_slice %3 {offsets = [0, 5], sizes = [64, 1], strides = [1, 1]} : vector<64x7xf32> to vector<64x1xf32>
    %15 = vector.shape_cast %14 : vector<64x1xf32> to vector<1x64x1xf32>
    %16 = vector.extract_strided_slice %3 {offsets = [0, 6], sizes = [64, 1], strides = [1, 1]} : vector<64x7xf32> to vector<64x1xf32>
    %17 = vector.shape_cast %16 : vector<64x1xf32> to vector<1x64x1xf32>
    %c3_i32 = arith.constant 3 : i32
    %18 = tpu.dynamic_rotate %0 by %c3_i32 dim 2 : vector<2x64x128xf32>, i32 -> vector<2x64x128xf32>
    %19 = vector.broadcast %5 : vector<1x64x1xf32> to vector<2x64x128xf32>
    %20 = arith.mulf %18, %19 : vector<2x64x128xf32>
    %c2_i32 = arith.constant 2 : i32
    %21 = tpu.dynamic_rotate %0 by %c2_i32 dim 2 : vector<2x64x128xf32>, i32 -> vector<2x64x128xf32>
    %22 = vector.broadcast %7 : vector<1x64x1xf32> to vector<2x64x128xf32>
    %23 = arith.mulf %21, %22 : vector<2x64x128xf32>
    %24 = arith.addf %20, %23 : vector<2x64x128xf32>
    %c1_i32 = arith.constant 1 : i32
    %25 = tpu.dynamic_rotate %0 by %c1_i32 dim 2 : vector<2x64x128xf32>, i32 -> vector<2x64x128xf32>
    %26 = vector.broadcast %9 : vector<1x64x1xf32> to vector<2x64x128xf32>
    %27 = arith.mulf %25, %26 : vector<2x64x128xf32>
    %28 = arith.addf %24, %27 : vector<2x64x128xf32>
    %29 = vector.broadcast %11 : vector<1x64x1xf32> to vector<2x64x128xf32>
    %30 = arith.mulf %0, %29 : vector<2x64x128xf32>
    %31 = arith.addf %28, %30 : vector<2x64x128xf32>
    %c127_i32 = arith.constant 127 : i32
    %32 = tpu.dynamic_rotate %0 by %c127_i32 dim 2 : vector<2x64x128xf32>, i32 -> vector<2x64x128xf32>
    %33 = vector.broadcast %13 : vector<1x64x1xf32> to vector<2x64x128xf32>
    %34 = arith.mulf %32, %33 : vector<2x64x128xf32>
    %35 = arith.addf %31, %34 : vector<2x64x128xf32>
    %c126_i32 = arith.constant 126 : i32
    %36 = tpu.dynamic_rotate %0 by %c126_i32 dim 2 : vector<2x64x128xf32>, i32 -> vector<2x64x128xf32>
    %37 = vector.broadcast %15 : vector<1x64x1xf32> to vector<2x64x128xf32>
    %38 = arith.mulf %36, %37 : vector<2x64x128xf32>
    %39 = arith.addf %35, %38 : vector<2x64x128xf32>
    %c125_i32 = arith.constant 125 : i32
    %40 = tpu.dynamic_rotate %0 by %c125_i32 dim 2 : vector<2x64x128xf32>, i32 -> vector<2x64x128xf32>
    %41 = vector.broadcast %17 : vector<1x64x1xf32> to vector<2x64x128xf32>
    %42 = arith.mulf %40, %41 : vector<2x64x128xf32>
    %43 = arith.addf %39, %42 : vector<2x64x128xf32>
    %44 = vector.broadcast %2 : vector<1x64x1xf32> to vector<2x64x128xf32>
    %45 = arith.addf %43, %44 : vector<2x64x128xf32>
    %c0_6 = arith.constant 0 : index
    %c0_7 = arith.constant 0 : index
    %c0_8 = arith.constant 0 : index
    %46 = vector.load %arg5[%c0_6, %c0_7, %c0_8] : memref<2x64x128xf32, #tpu.memory_space<vmem>>, vector<2x64x128xf32>
    tpu.vector_store %arg5[%c0_6, %c0_7, %c0_8], %45 {strides = array<i32>} : memref<2x64x128xf32, #tpu.memory_space<vmem>>, vector<2x64x128xf32>,
    %cst = arith.constant 0.000000e+00 : f32
    %47 = vector.broadcast %cst : f32 to vector<2x64x3xf32>
    %48 = vector.extract_strided_slice %0 {offsets = [0, 0, 0], sizes = [2, 64, 6], strides = [1, 1, 1]} : vector<2x64x128xf32> to vector<2x64x6xf32>
    %49 = tpu.concatenate %47, %48 in 2 : vector<2x64x3xf32>, vector<2x64x6xf32> -> vector<2x64x9xf32>
    %50 = vector.extract_strided_slice %49 {offsets = [0, 0, 0], sizes = [2, 64, 3], strides = [1, 1, 1]} : vector<2x64x9xf32> to vector<2x64x3xf32>
    %51 = vector.broadcast %5 : vector<1x64x1xf32> to vector<2x64x3xf32>
    %52 = arith.mulf %50, %51 : vector<2x64x3xf32>
    %53 = vector.extract_strided_slice %49 {offsets = [0, 0, 1], sizes = [2, 64, 3], strides = [1, 1, 1]} : vector<2x64x9xf32> to vector<2x64x3xf32>
    %54 = vector.broadcast %7 : vector<1x64x1xf32> to vector<2x64x3xf32>
    %55 = arith.mulf %53, %54 : vector<2x64x3xf32>
    %56 = arith.addf %52, %55 : vector<2x64x3xf32>
    %57 = vector.extract_strided_slice %49 {offsets = [0, 0, 2], sizes = [2, 64, 3], strides = [1, 1, 1]} : vector<2x64x9xf32> to vector<2x64x3xf32>
    %58 = vector.broadcast %9 : vector<1x64x1xf32> to vector<2x64x3xf32>
    %59 = arith.mulf %57, %58 : vector<2x64x3xf32>
    %60 = arith.addf %56, %59 : vector<2x64x3xf32>
    %61 = vector.extract_strided_slice %49 {offsets = [0, 0, 3], sizes = [2, 64, 3], strides = [1, 1, 1]} : vector<2x64x9xf32> to vector<2x64x3xf32>
    %62 = vector.broadcast %11 : vector<1x64x1xf32> to vector<2x64x3xf32>
    %63 = arith.mulf %61, %62 : vector<2x64x3xf32>
    %64 = arith.addf %60, %63 : vector<2x64x3xf32>
    %65 = vector.extract_strided_slice %49 {offsets = [0, 0, 4], sizes = [2, 64, 3], strides = [1, 1, 1]} : vector<2x64x9xf32> to vector<2x64x3xf32>
    %66 = vector.broadcast %13 : vector<1x64x1xf32> to vector<2x64x3xf32>
    %67 = arith.mulf %65, %66 : vector<2x64x3xf32>
    %68 = arith.addf %64, %67 : vector<2x64x3xf32>
    %69 = vector.extract_strided_slice %49 {offsets = [0, 0, 5], sizes = [2, 64, 3], strides = [1, 1, 1]} : vector<2x64x9xf32> to vector<2x64x3xf32>
    %70 = vector.broadcast %15 : vector<1x64x1xf32> to vector<2x64x3xf32>
    %71 = arith.mulf %69, %70 : vector<2x64x3xf32>
    %72 = arith.addf %68, %71 : vector<2x64x3xf32>
    %73 = vector.extract_strided_slice %49 {offsets = [0, 0, 6], sizes = [2, 64, 3], strides = [1, 1, 1]} : vector<2x64x9xf32> to vector<2x64x3xf32>
    %74 = vector.broadcast %17 : vector<1x64x1xf32> to vector<2x64x3xf32>
    %75 = arith.mulf %73, %74 : vector<2x64x3xf32>
    %76 = arith.addf %72, %75 : vector<2x64x3xf32>
    %77 = vector.broadcast %2 : vector<1x64x1xf32> to vector<2x64x3xf32>
    %78 = arith.addf %76, %77 : vector<2x64x3xf32>
    %c0_9 = arith.constant 0 : index
    %c0_10 = arith.constant 0 : index
    %c0_11 = arith.constant 0 : index
    %79 = vector.load %arg5[%c0_9, %c0_10, %c0_11] : memref<2x64x128xf32, #tpu.memory_space<vmem>>, vector<2x64x3xf32>
    tpu.vector_store %arg5[%c0_9, %c0_10, %c0_11], %78 {strides = array<i32>} : memref<2x64x128xf32, #tpu.memory_space<vmem>>, vector<2x64x3xf32>,
    %80 = vector.extract_strided_slice %0 {offsets = [0, 0, 122], sizes = [2, 64, 6], strides = [1, 1, 1]} : vector<2x64x128xf32> to vector<2x64x6xf32>
    %cst_12 = arith.constant 0.000000e+00 : f32
    %81 = vector.broadcast %cst_12 : f32 to vector<2x64x3xf32>
    %82 = tpu.concatenate %80, %81 in 2 : vector<2x64x6xf32>, vector<2x64x3xf32> -> vector<2x64x9xf32>
    %83 = vector.extract_strided_slice %82 {offsets = [0, 0, 0], sizes = [2, 64, 3], strides = [1, 1, 1]} : vector<2x64x9xf32> to vector<2x64x3xf32>
    %84 = vector.broadcast %5 : vector<1x64x1xf32> to vector<2x64x3xf32>
    %85 = arith.mulf %83, %84 : vector<2x64x3xf32>
    %86 = vector.extract_strided_slice %82 {offsets = [0, 0, 1], sizes = [2, 64, 3], strides = [1, 1, 1]} : vector<2x64x9xf32> to vector<2x64x3xf32>
    %87 = vector.broadcast %7 : vector<1x64x1xf32> to vector<2x64x3xf32>
    %88 = arith.mulf %86, %87 : vector<2x64x3xf32>
    %89 = arith.addf %85, %88 : vector<2x64x3xf32>
    %90 = vector.extract_strided_slice %82 {offsets = [0, 0, 2], sizes = [2, 64, 3], strides = [1, 1, 1]} : vector<2x64x9xf32> to vector<2x64x3xf32>
    %91 = vector.broadcast %9 : vector<1x64x1xf32> to vector<2x64x3xf32>
    %92 = arith.mulf %90, %91 : vector<2x64x3xf32>
    %93 = arith.addf %89, %92 : vector<2x64x3xf32>
    %94 = vector.extract_strided_slice %82 {offsets = [0, 0, 3], sizes = [2, 64, 3], strides = [1, 1, 1]} : vector<2x64x9xf32> to vector<2x64x3xf32>
    %95 = vector.broadcast %11 : vector<1x64x1xf32> to vector<2x64x3xf32>
    %96 = arith.mulf %94, %95 : vector<2x64x3xf32>
    %97 = arith.addf %93, %96 : vector<2x64x3xf32>
    %98 = vector.extract_strided_slice %82 {offsets = [0, 0, 4], sizes = [2, 64, 3], strides = [1, 1, 1]} : vector<2x64x9xf32> to vector<2x64x3xf32>
    %99 = vector.broadcast %13 : vector<1x64x1xf32> to vector<2x64x3xf32>
    %100 = arith.mulf %98, %99 : vector<2x64x3xf32>
    %101 = arith.addf %97, %100 : vector<2x64x3xf32>
    %102 = vector.extract_strided_slice %82 {offsets = [0, 0, 5], sizes = [2, 64, 3], strides = [1, 1, 1]} : vector<2x64x9xf32> to vector<2x64x3xf32>
    %103 = vector.broadcast %15 : vector<1x64x1xf32> to vector<2x64x3xf32>
    %104 = arith.mulf %102, %103 : vector<2x64x3xf32>
    %105 = arith.addf %101, %104 : vector<2x64x3xf32>
    %106 = vector.extract_strided_slice %82 {offsets = [0, 0, 6], sizes = [2, 64, 3], strides = [1, 1, 1]} : vector<2x64x9xf32> to vector<2x64x3xf32>
    %107 = vector.broadcast %17 : vector<1x64x1xf32> to vector<2x64x3xf32>
    %108 = arith.mulf %106, %107 : vector<2x64x3xf32>
    %109 = arith.addf %105, %108 : vector<2x64x3xf32>
    %110 = vector.broadcast %2 : vector<1x64x1xf32> to vector<2x64x3xf32>
    %111 = arith.addf %109, %110 : vector<2x64x3xf32>
    %c0_13 = arith.constant 0 : index
    %c0_14 = arith.constant 0 : index
    %c125 = arith.constant 125 : index
    %112 = vector.load %arg5[%c0_13, %c0_14, %c125] : memref<2x64x128xf32, #tpu.memory_space<vmem>>, vector<2x64x3xf32>
    tpu.vector_store %arg5[%c0_13, %c0_14, %c125], %111 {strides = array<i32>} : memref<2x64x128xf32, #tpu.memory_space<vmem>>, vector<2x64x3xf32>,
    return
  }
  func.func @transform_0(%arg0: i32, %arg1: i32) -> (i32, i32, i32) {
    %c0_i32 = arith.constant 0 : i32
    %c0_i32_0 = arith.constant 0 : i32
    return %arg0, %arg1, %c0_i32 : i32, i32, i32
  }
  func.func @transform_1(%arg0: i32, %arg1: i32) -> (i32, i32) {
    %c0_i32 = arith.constant 0 : i32
    %c0_i32_0 = arith.constant 0 : i32
    return %arg1, %c0_i32 : i32, i32
  }
  func.func @transform_2(%arg0: i32, %arg1: i32) -> (i32, i32) {
    %c0_i32 = arith.constant 0 : i32
    %c0_i32_0 = arith.constant 0 : i32
    return %arg1, %c0_i32 : i32, i32
  }
  func.func @transform_3(%arg0: i32, %arg1: i32) -> (i32, i32, i32) {
    %c0_i32 = arith.constant 0 : i32
    %c0_i32_0 = arith.constant 0 : i32
    return %arg0, %arg1, %c0_i32 : i32, i32, i32
  }
}

</mosaic_0001>

<llo_original>
// kernel: tpu_custom_call.1
$region0: #{tpu_custom_call.1}
  #allocation0 [shape = 'u32[]', space=smem, size = 0x4, offset = 0x4, fixed_abs, tag = 'smem constant byte address 0x4 - core index']
  #allocation1 [shape = 'u32[144,128]{1,0:T(1,128)}', space=vmem, size = 0x12000, scoped, tag = 'internal scratch']
  %s0 = inlined_call_operand.vmem [shape: f32[2,64,128], index: 0, kind: input, shape index: {}]
  %s1 = inlined_call_operand.vmem [shape: f32[64,7], index: 1, kind: input, shape index: {}]
  %s2 = inlined_call_operand.vmem [shape: f32[64,1], index: 2, kind: input, shape index: {}]
  %s3 = inlined_call_operand.hbm [shape: f32[2,64,128], index: 3, kind: output, shape index: {}]
  %s4 = sld [smem:[#allocation0]]
  $region22: #{tpu_custom_call.1} parent=0
    _
  %s6 = ssub.s32 1, %s4
  %s7 = scalar_select 0, %s6, %s4
  $region1: #{tpu_custom_call.1} parent=0
    #allocation2 [shape = 'u8[65536]{0}', space=vmem, size = 0x10000, scoped, tag = 'output window, operand 0, single buffered']
    #allocation3 [shape = 's32[1]{0}', space=sflag, size = 0x4, scoped, tag = 'scoped memory for tpu_custom_call.1']
    %8 = vsyncpa [#allocation3], 0
    // Predicated region
    $region2: #{tpu_custom_call.1} parent=1 // pred_check
      _
    $region3: #{tpu_custom_call.1} parent=1 // pred_check_branch
      %10 = sbr.rel (0) target = $region5
    $region4: #{tpu_custom_call.1} parent=1 // pred_region
      _
    $region5: #{tpu_custom_call.1} parent=1 // pred_fallthru
      _
    // Predicated region
    $region6: #{tpu_custom_call.1} parent=1 // pred_check
      _
    $region7: #{tpu_custom_call.1} parent=1 // pred_check_branch
      %12 = sbr.rel (0) target = $region9
    $region8: #{tpu_custom_call.1} parent=1 // pred_region
      _
    $region9: #{tpu_custom_call.1} parent=1 // pred_fallthru
      _
    // Predicated region
    $region10: #{tpu_custom_call.1} parent=1 // pred_check
      _
    $region11: #{tpu_custom_call.1} parent=1 // pred_check_branch
      %14 = sbr.rel (0) target = $region13
    $region12: #{tpu_custom_call.1} parent=1 // pred_region
      _
    $region13: #{tpu_custom_call.1} parent=1 // pred_fallthru
      _
    %v15 = vld [vmem:[%s0] sm:$0xff]
    %v16 = vld [vmem:[%s0 + $0x8] sm:$0xff]
    %v17 = vld [vmem:[%s0 + $0x10] sm:$0xff]
    %v18 = vld [vmem:[%s0 + $0x18] sm:$0xff]
    %v19 = vld [vmem:[%s0 + $0x20] sm:$0xff]
    %v20 = vld [vmem:[%s0 + $0x28] sm:$0xff]
    %v21 = vld [vmem:[%s0 + $0x30] sm:$0xff]
    %v22 = vld [vmem:[%s0 + $0x38] sm:$0xff]
    %v23 = vld [vmem:[%s0 + $0x40] sm:$0xff]
    %v24 = vld [vmem:[%s0 + $0x48] sm:$0xff]
    %v25 = vld [vmem:[%s0 + $0x50] sm:$0xff]
    %v26 = vld [vmem:[%s0 + $0x58] sm:$0xff]
    %v27 = vld [vmem:[%s0 + $0x60] sm:$0xff]
    %v28 = vld [vmem:[%s0 + $0x68] sm:$0xff]
    %v29 = vld [vmem:[%s0 + $0x70] sm:$0xff]
    %v30 = vld [vmem:[%s0 + $0x78] sm:$0xff]
    %v31 = vld [vmem:[%s2] sm:$0xff]
    %v32 = vld [vmem:[%s2 + $0x8] sm:$0xff]
    %v33 = vld [vmem:[%s2 + $0x10] sm:$0xff]
    %v34 = vld [vmem:[%s2 + $0x18] sm:$0xff]
    %v35 = vld [vmem:[%s2 + $0x20] sm:$0xff]
    %v36 = vld [vmem:[%s2 + $0x28] sm:$0xff]
    %v37 = vld [vmem:[%s2 + $0x30] sm:$0xff]
    %v38 = vld [vmem:[%s2 + $0x38] sm:$0xff]
    %v39 = vld [vmem:[%s1] sm:$0xff]
    %v40 = vld [vmem:[%s1 + $0x8] sm:$0xff]
    %v41 = vld [vmem:[%s1 + $0x10] sm:$0xff]
    %v42 = vld [vmem:[%s1 + $0x18] sm:$0xff]
    %v43 = vld [vmem:[%s1 + $0x20] sm:$0xff]
    %v44 = vld [vmem:[%s1 + $0x28] sm:$0xff]
    %v45 = vld [vmem:[%s1 + $0x30] sm:$0xff]
    %v46 = vld [vmem:[%s1 + $0x38] sm:$0xff]
    %47 = vrot.lane.b32.xlu0 %v15, 3
    %v48 = vpop.permute.xlu0 %47
    %49 = vrot.lane.b32.xlu0 %v16, 3
    %v50 = vpop.permute.xlu0 %49
    %51 = vrot.lane.b32.xlu0 %v17, 3
    %v52 = vpop.permute.xlu0 %51
    %53 = vrot.lane.b32.xlu0 %v18, 3
    %v54 = vpop.permute.xlu0 %53
    %55 = vrot.lane.b32.xlu0 %v19, 3
    %v56 = vpop.permute.xlu0 %55
    %57 = vrot.lane.b32.xlu0 %v20, 3
    %v58 = vpop.permute.xlu0 %57
    %59 = vrot.lane.b32.xlu0 %v21, 3
    %v60 = vpop.permute.xlu0 %59
    %61 = vrot.lane.b32.xlu0 %v22, 3
    %v62 = vpop.permute.xlu0 %61
    %63 = vrot.lane.b32.xlu0 %v23, 3
    %v64 = vpop.permute.xlu0 %63
    %65 = vrot.lane.b32.xlu0 %v24, 3
    %v66 = vpop.permute.xlu0 %65
    %67 = vrot.lane.b32.xlu0 %v25, 3
    %v68 = vpop.permute.xlu0 %67
    %69 = vrot.lane.b32.xlu0 %v26, 3
    %v70 = vpop.permute.xlu0 %69
    %71 = vrot.lane.b32.xlu0 %v27, 3
    %v72 = vpop.permute.xlu0 %71
    %73 = vrot.lane.b32.xlu0 %v28, 3
    %v74 = vpop.permute.xlu0 %73
    %75 = vrot.lane.b32.xlu0 %v29, 3
    %v76 = vpop.permute.xlu0 %75
    %77 = vrot.lane.b32.xlu0 %v30, 3
    %v78 = vpop.permute.xlu0 %77
    %80 = vset.pattern.permute.xlu0 0
    %81 = vperm.xlu0 %80, %v39
    %v82 = vpop.permute.xlu0 %81
    %85 = vset.pattern.permute.xlu0 0
    %86 = vperm.xlu0 %85, %v40
    %v87 = vpop.permute.xlu0 %86
    %90 = vset.pattern.permute.xlu0 0
    %91 = vperm.xlu0 %90, %v41
    %v92 = vpop.permute.xlu0 %91
    %95 = vset.pattern.permute.xlu0 0
    %96 = vperm.xlu0 %95, %v42
    %v97 = vpop.permute.xlu0 %96
    %100 = vset.pattern.permute.xlu0 0
    %101 = vperm.xlu0 %100, %v43
    %v102 = vpop.permute.xlu0 %101
    %105 = vset.pattern.permute.xlu0 0
    %106 = vperm.xlu0 %105, %v44
    %v107 = vpop.permute.xlu0 %106
    %110 = vset.pattern.permute.xlu0 0
    %111 = vperm.xlu0 %110, %v45
    %v112 = vpop.permute.xlu0 %111
    %115 = vset.pattern.permute.xlu0 0
    %116 = vperm.xlu0 %115, %v46
    %v117 = vpop.permute.xlu0 %116
    %v119 = vmul.f32 %v48, %v82
    %v120 = vmul.f32 %v50, %v87
    %v121 = vmul.f32 %v52, %v92
    %v122 = vmul.f32 %v54, %v97
    %v123 = vmul.f32 %v56, %v102
    %v124 = vmul.f32 %v58, %v107
    %v125 = vmul.f32 %v60, %v112
    %v126 = vmul.f32 %v62, %v117
    %v127 = vmul.f32 %v64, %v82
    %v128 = vmul.f32 %v66, %v87
    %v129 = vmul.f32 %v68, %v92
    %v130 = vmul.f32 %v70, %v97
    %v131 = vmul.f32 %v72, %v102
    %v132 = vmul.f32 %v74, %v107
    %v133 = vmul.f32 %v76, %v112
    %v134 = vmul.f32 %v78, %v117
    %135 = vrot.lane.b32.xlu0 %v15, 2
    %v136 = vpop.permute.xlu0 %135
    %137 = vrot.lane.b32.xlu0 %v16, 2
    %v138 = vpop.permute.xlu0 %137
    %139 = vrot.lane.b32.xlu0 %v17, 2
    %v140 = vpop.permute.xlu0 %139
    %141 = vrot.lane.b32.xlu0 %v18, 2
    %v142 = vpop.permute.xlu0 %141
    %143 = vrot.lane.b32.xlu0 %v19, 2
    %v144 = vpop.permute.xlu0 %143
    %145 = vrot.lane.b32.xlu0 %v20, 2
    %v146 = vpop.permute.xlu0 %145
    %147 = vrot.lane.b32.xlu0 %v21, 2
    %v148 = vpop.permute.xlu0 %147
    %149 = vrot.lane.b32.xlu0 %v22, 2
    %v150 = vpop.permute.xlu0 %149
    %151 = vrot.lane.b32.xlu0 %v23, 2
    %v152 = vpop.permute.xlu0 %151
    %153 = vrot.lane.b32.xlu0 %v24, 2
    %v154 = vpop.permute.xlu0 %153
    %155 = vrot.lane.b32.xlu0 %v25, 2
    %v156 = vpop.permute.xlu0 %155
    %157 = vrot.lane.b32.xlu0 %v26, 2
    %v158 = vpop.permute.xlu0 %157
    %159 = vrot.lane.b32.xlu0 %v27, 2
    %v160 = vpop.permute.xlu0 %159
    %161 = vrot.lane.b32.xlu0 %v28, 2
    %v162 = vpop.permute.xlu0 %161
    %163 = vrot.lane.b32.xlu0 %v29, 2
    %v164 = vpop.permute.xlu0 %163
    %165 = vrot.lane.b32.xlu0 %v30, 2
    %v166 = vpop.permute.xlu0 %165
    %167 = vset.pattern.permute.xlu0 1
    %168 = vperm.xlu0 %167, %v39
    %v169 = vpop.permute.xlu0 %168
    %171 = vset.pattern.permute.xlu0 1
    %172 = vperm.xlu0 %171, %v40
    %v173 = vpop.permute.xlu0 %172
    %175 = vset.pattern.permute.xlu0 1
    %176 = vperm.xlu0 %175, %v41
    %v177 = vpop.permute.xlu0 %176
    %179 = vset.pattern.permute.xlu0 1
    %180 = vperm.xlu0 %179, %v42
    %v181 = vpop.permute.xlu0 %180
    %183 = vset.pattern.permute.xlu0 1
    %184 = vperm.xlu0 %183, %v43
    %v185 = vpop.permute.xlu0 %184
    %187 = vset.pattern.permute.xlu0 1
    %188 = vperm.xlu0 %187, %v44
    %v189 = vpop.permute.xlu0 %188
    %191 = vset.pattern.permute.xlu0 1
    %192 = vperm.xlu0 %191, %v45
    %v193 = vpop.permute.xlu0 %192
    %195 = vset.pattern.permute.xlu0 1
    %196 = vperm.xlu0 %195, %v46
    %v197 = vpop.permute.xlu0 %196
    %v199 = vmul.f32 %v136, %v169
    %v200 = vmul.f32 %v138, %v173
    %v201 = vmul.f32 %v140, %v177
    %v202 = vmul.f32 %v142, %v181
    %v203 = vmul.f32 %v144, %v185
    %v204 = vmul.f32 %v146, %v189
    %v205 = vmul.f32 %v148, %v193
    %v206 = vmul.f32 %v150, %v197
    %v207 = vmul.f32 %v152, %v169
    %v208 = vmul.f32 %v154, %v173
    %v209 = vmul.f32 %v156, %v177
    %v210 = vmul.f32 %v158, %v181
    %v211 = vmul.f32 %v160, %v185
    %v212 = vmul.f32 %v162, %v189
    %v213 = vmul.f32 %v164, %v193
    %v214 = vmul.f32 %v166, %v197
    %v215 = vadd.f32 %v119, %v199
    %v216 = vadd.f32 %v120, %v200
    %v217 = vadd.f32 %v121, %v201
    %v218 = vadd.f32 %v122, %v202
    %v219 = vadd.f32 %v123, %v203
    %v220 = vadd.f32 %v124, %v204
    %v221 = vadd.f32 %v125, %v205
    %v222 = vadd.f32 %v126, %v206
    %v223 = vadd.f32 %v127, %v207
    %v224 = vadd.f32 %v128, %v208
    %v225 = vadd.f32 %v129, %v209
    %v226 = vadd.f32 %v130, %v210
    %v227 = vadd.f32 %v131, %v211
    %v228 = vadd.f32 %v132, %v212
    %v229 = vadd.f32 %v133, %v213
    %v230 = vadd.f32 %v134, %v214
    %231 = vrot.lane.b32.xlu0 %v15, 1
    %v232 = vpop.permute.xlu0 %231
    %233 = vrot.lane.b32.xlu0 %v16, 1
    %v234 = vpop.permute.xlu0 %233
    %235 = vrot.lane.b32.xlu0 %v17, 1
    %v236 = vpop.permute.xlu0 %235
    %237 = vrot.lane.b32.xlu0 %v18, 1
    %v238 = vpop.permute.xlu0 %237
    %239 = vrot.lane.b32.xlu0 %v19, 1
    %v240 = vpop.permute.xlu0 %239
    %241 = vrot.lane.b32.xlu0 %v20, 1
    %v242 = vpop.permute.xlu0 %241
    %243 = vrot.lane.b32.xlu0 %v21, 1
    %v244 = vpop.permute.xlu0 %243
    %245 = vrot.lane.b32.xlu0 %v22, 1
    %v246 = vpop.permute.xlu0 %245
    %247 = vrot.lane.b32.xlu0 %v23, 1
    %v248 = vpop.permute.xlu0 %247
    %249 = vrot.lane.b32.xlu0 %v24, 1
    %v250 = vpop.permute.xlu0 %249
    %251 = vrot.lane.b32.xlu0 %v25, 1
    %v252 = vpop.permute.xlu0 %251
    %253 = vrot.lane.b32.xlu0 %v26, 1
    %v254 = vpop.permute.xlu0 %253
    %255 = vrot.lane.b32.xlu0 %v27, 1
    %v256 = vpop.permute.xlu0 %255
    %257 = vrot.lane.b32.xlu0 %v28, 1
    %v258 = vpop.permute.xlu0 %257
    %259 = vrot.lane.b32.xlu0 %v29, 1
    %v260 = vpop.permute.xlu0 %259
    %261 = vrot.lane.b32.xlu0 %v30, 1
    %v262 = vpop.permute.xlu0 %261
    %263 = vset.pattern.permute.xlu0 2
    %264 = vperm.xlu0 %263, %v39
    %v265 = vpop.permute.xlu0 %264
    %267 = vset.pattern.permute.xlu0 2
    %268 = vperm.xlu0 %267, %v40
    %v269 = vpop.permute.xlu0 %268
    %271 = vset.pattern.permute.xlu0 2
    %272 = vperm.xlu0 %271, %v41
    %v273 = vpop.permute.xlu0 %272
    %275 = vset.pattern.permute.xlu0 2
    %276 = vperm.xlu0 %275, %v42
    %v277 = vpop.permute.xlu0 %276
    %279 = vset.pattern.permute.xlu0 2
    %280 = vperm.xlu0 %279, %v43
    %v281 = vpop.permute.xlu0 %280
    %283 = vset.pattern.permute.xlu0 2
    %284 = vperm.xlu0 %283, %v44
    %v285 = vpop.permute.xlu0 %284
    %287 = vset.pattern.permute.xlu0 2
    %288 = vperm.xlu0 %287, %v45
    %v289 = vpop.permute.xlu0 %288
    %291 = vset.pattern.permute.xlu0 2
    %292 = vperm.xlu0 %291, %v46
    %v293 = vpop.permute.xlu0 %292
    %v295 = vmul.f32 %v232, %v265
    %v296 = vmul.f32 %v234, %v269
    %v297 = vmul.f32 %v236, %v273
    %v298 = vmul.f32 %v238, %v277
    %v299 = vmul.f32 %v240, %v281
    %v300 = vmul.f32 %v242, %v285
    %v301 = vmul.f32 %v244, %v289
    %v302 = vmul.f32 %v246, %v293
    %v303 = vmul.f32 %v248, %v265
    %v304 = vmul.f32 %v250, %v269
    %v305 = vmul.f32 %v252, %v273
    %v306 = vmul.f32 %v254, %v277
    %v307 = vmul.f32 %v256, %v281
    %v308 = vmul.f32 %v258, %v285
    %v309 = vmul.f32 %v260, %v289
    %v310 = vmul.f32 %v262, %v293
    %v311 = vadd.f32 %v215, %v295
    %v312 = vadd.f32 %v216, %v296
    %v313 = vadd.f32 %v217, %v297
    %v314 = vadd.f32 %v218, %v298
    %v315 = vadd.f32 %v219, %v299
    %v316 = vadd.f32 %v220, %v300
    %v317 = vadd.f32 %v221, %v301
    %v318 = vadd.f32 %v222, %v302
    %v319 = vadd.f32 %v223, %v303
    %v320 = vadd.f32 %v224, %v304
    %v321 = vadd.f32 %v225, %v305
    %v322 = vadd.f32 %v226, %v306
    %v323 = vadd.f32 %v227, %v307
    %v324 = vadd.f32 %v228, %v308
    %v325 = vadd.f32 %v229, %v309
    %v326 = vadd.f32 %v230, %v310
    %327 = vset.pattern.permute.xlu0 3
    %328 = vperm.xlu0 %327, %v39
    %v329 = vpop.permute.xlu0 %328
    %331 = vset.pattern.permute.xlu0 3
    %332 = vperm.xlu0 %331, %v40
    %v333 = vpop.permute.xlu0 %332
    %335 = vset.pattern.permute.xlu0 3
    %336 = vperm.xlu0 %335, %v41
    %v337 = vpop.permute.xlu0 %336
    %339 = vset.pattern.permute.xlu0 3
    %340 = vperm.xlu0 %339, %v42
    %v341 = vpop.permute.xlu0 %340
    %343 = vset.pattern.permute.xlu0 3
    %344 = vperm.xlu0 %343, %v43
    %v345 = vpop.permute.xlu0 %344
    %347 = vset.pattern.permute.xlu0 3
    %348 = vperm.xlu0 %347, %v44
    %v349 = vpop.permute.xlu0 %348
    %351 = vset.pattern.permute.xlu0 3
    %352 = vperm.xlu0 %351, %v45
    %v353 = vpop.permute.xlu0 %352
    %355 = vset.pattern.permute.xlu0 3
    %356 = vperm.xlu0 %355, %v46
    %v357 = vpop.permute.xlu0 %356
    %v359 = vmul.f32 %v15, %v329
    %v360 = vmul.f32 %v16, %v333
    %v361 = vmul.f32 %v17, %v337
    %v362 = vmul.f32 %v18, %v341
    %v363 = vmul.f32 %v19, %v345
    %v364 = vmul.f32 %v20, %v349
    %v365 = vmul.f32 %v21, %v353
    %v366 = vmul.f32 %v22, %v357
    %v367 = vmul.f32 %v23, %v329
    %v368 = vmul.f32 %v24, %v333
    %v369 = vmul.f32 %v25, %v337
    %v370 = vmul.f32 %v26, %v341
    %v371 = vmul.f32 %v27, %v345
    %v372 = vmul.f32 %v28, %v349
    %v373 = vmul.f32 %v29, %v353
    %v374 = vmul.f32 %v30, %v357
    %v375 = vadd.f32 %v311, %v359
    %v376 = vadd.f32 %v312, %v360
    %v377 = vadd.f32 %v313, %v361
    %v378 = vadd.f32 %v314, %v362
    %v379 = vadd.f32 %v315, %v363
    %v380 = vadd.f32 %v316, %v364
    %v381 = vadd.f32 %v317, %v365
    %v382 = vadd.f32 %v318, %v366
    %v383 = vadd.f32 %v319, %v367
    %v384 = vadd.f32 %v320, %v368
    %v385 = vadd.f32 %v321, %v369
    %v386 = vadd.f32 %v322, %v370
    %v387 = vadd.f32 %v323, %v371
    %v388 = vadd.f32 %v324, %v372
    %v389 = vadd.f32 %v325, %v373
    %v390 = vadd.f32 %v326, %v374
    %391 = vrot.lane.b32.xlu0 %v15, 127
    %v392 = vpop.permute.xlu0 %391
    %393 = vrot.lane.b32.xlu0 %v16, 127
    %v394 = vpop.permute.xlu0 %393
    %395 = vrot.lane.b32.xlu0 %v17, 127
    %v396 = vpop.permute.xlu0 %395
    %397 = vrot.lane.b32.xlu0 %v18, 127
    %v398 = vpop.permute.xlu0 %397
    %399 = vrot.lane.b32.xlu0 %v19, 127
    %v400 = vpop.permute.xlu0 %399
    %401 = vrot.lane.b32.xlu0 %v20, 127
    %v402 = vpop.permute.xlu0 %401
    %403 = vrot.lane.b32.xlu0 %v21, 127
    %v404 = vpop.permute.xlu0 %403
    %405 = vrot.lane.b32.xlu0 %v22, 127
    %v406 = vpop.permute.xlu0 %405
    %407 = vrot.lane.b32.xlu0 %v23, 127
    %v408 = vpop.permute.xlu0 %407
    %409 = vrot.lane.b32.xlu0 %v24, 127
    %v410 = vpop.permute.xlu0 %409
    %411 = vrot.lane.b32.xlu0 %v25, 127
    %v412 = vpop.permute.xlu0 %411
    %413 = vrot.lane.b32.xlu0 %v26, 127
    %v414 = vpop.permute.xlu0 %413
    %415 = vrot.lane.b32.xlu0 %v27, 127
    %v416 = vpop.permute.xlu0 %415
    %417 = vrot.lane.b32.xlu0 %v28, 127
    %v418 = vpop.permute.xlu0 %417
    %419 = vrot.lane.b32.xlu0 %v29, 127
    %v420 = vpop.permute.xlu0 %419
    %421 = vrot.lane.b32.xlu0 %v30, 127
    %v422 = vpop.permute.xlu0 %421
    %423 = vset.pattern.permute.xlu0 4
    %424 = vperm.xlu0 %423, %v39
    %v425 = vpop.permute.xlu0 %424
    %427 = vset.pattern.permute.xlu0 4
    %428 = vperm.xlu0 %427, %v40
    %v429 = vpop.permute.xlu0 %428
    %431 = vset.pattern.permute.xlu0 4
    %432 = vperm.xlu0 %431, %v41
    %v433 = vpop.permute.xlu0 %432
    %435 = vset.pattern.permute.xlu0 4
    %436 = vperm.xlu0 %435, %v42
    %v437 = vpop.permute.xlu0 %436
    %439 = vset.pattern.permute.xlu0 4
    %440 = vperm.xlu0 %439, %v43
    %v441 = vpop.permute.xlu0 %440
    %443 = vset.pattern.permute.xlu0 4
    %444 = vperm.xlu0 %443, %v44
    %v445 = vpop.permute.xlu0 %444
    %447 = vset.pattern.permute.xlu0 4
    %448 = vperm.xlu0 %447, %v45
    %v449 = vpop.permute.xlu0 %448
    %451 = vset.pattern.permute.xlu0 4
    %452 = vperm.xlu0 %451, %v46
    %v453 = vpop.permute.xlu0 %452
    %v455 = vmul.f32 %v392, %v425
    %v456 = vmul.f32 %v394, %v429
    %v457 = vmul.f32 %v396, %v433
    %v458 = vmul.f32 %v398, %v437
    %v459 = vmul.f32 %v400, %v441
    %v460 = vmul.f32 %v402, %v445
    %v461 = vmul.f32 %v404, %v449
    %v462 = vmul.f32 %v406, %v453
    %v463 = vmul.f32 %v408, %v425
    %v464 = vmul.f32 %v410, %v429
    %v465 = vmul.f32 %v412, %v433
    %v466 = vmul.f32 %v414, %v437
    %v467 = vmul.f32 %v416, %v441
    %v468 = vmul.f32 %v418, %v445
    %v469 = vmul.f32 %v420, %v449
    %v470 = vmul.f32 %v422, %v453
    %v471 = vadd.f32 %v375, %v455
    %v472 = vadd.f32 %v376, %v456
    %v473 = vadd.f32 %v377, %v457
    %v474 = vadd.f32 %v378, %v458
    %v475 = vadd.f32 %v379, %v459
    %v476 = vadd.f32 %v380, %v460
    %v477 = vadd.f32 %v381, %v461
    %v478 = vadd.f32 %v382, %v462
    %v479 = vadd.f32 %v383, %v463
    %v480 = vadd.f32 %v384, %v464
    %v481 = vadd.f32 %v385, %v465
    %v482 = vadd.f32 %v386, %v466
    %v483 = vadd.f32 %v387, %v467
    %v484 = vadd.f32 %v388, %v468
    %v485 = vadd.f32 %v389, %v469
    %v486 = vadd.f32 %v390, %v470
    %487 = vrot.lane.b32.xlu0 %v15, 126
    %v488 = vpop.permute.xlu0 %487
    %489 = vrot.lane.b32.xlu0 %v16, 126
    %v490 = vpop.permute.xlu0 %489
    %491 = vrot.lane.b32.xlu0 %v17, 126
    %v492 = vpop.permute.xlu0 %491
    %493 = vrot.lane.b32.xlu0 %v18, 126
    %v494 = vpop.permute.xlu0 %493
    %495 = vrot.lane.b32.xlu0 %v19, 126
    %v496 = vpop.permute.xlu0 %495
    %497 = vrot.lane.b32.xlu0 %v20, 126
    %v498 = vpop.permute.xlu0 %497
    %499 = vrot.lane.b32.xlu0 %v21, 126
    %v500 = vpop.permute.xlu0 %499
    %501 = vrot.lane.b32.xlu0 %v22, 126
    %v502 = vpop.permute.xlu0 %501
    %503 = vrot.lane.b32.xlu0 %v23, 126
    %v504 = vpop.permute.xlu0 %503
    %505 = vrot.lane.b32.xlu0 %v24, 126
    %v506 = vpop.permute.xlu0 %505
    %507 = vrot.lane.b32.xlu0 %v25, 126
    %v508 = vpop.permute.xlu0 %507
    %509 = vrot.lane.b32.xlu0 %v26, 126
    %v510 = vpop.permute.xlu0 %509
    %511 = vrot.lane.b32.xlu0 %v27, 126
    %v512 = vpop.permute.xlu0 %511
    %513 = vrot.lane.b32.xlu0 %v28, 126
    %v514 = vpop.permute.xlu0 %513
    %515 = vrot.lane.b32.xlu0 %v29, 126
    %v516 = vpop.permute.xlu0 %515
    %517 = vrot.lane.b32.xlu0 %v30, 126
    %v518 = vpop.permute.xlu0 %517
    %519 = vset.pattern.permute.xlu0 5
    %520 = vperm.xlu0 %519, %v39
    %v521 = vpop.permute.xlu0 %520
    %523 = vset.pattern.permute.xlu0 5
    %524 = vperm.xlu0 %523, %v40
    %v525 = vpop.permute.xlu0 %524
    %527 = vset.pattern.permute.xlu0 5
    %528 = vperm.xlu0 %527, %v41
    %v529 = vpop.permute.xlu0 %528
    %531 = vset.pattern.permute.xlu0 5
    %532 = vperm.xlu0 %531, %v42
    %v533 = vpop.permute.xlu0 %532
    %535 = vset.pattern.permute.xlu0 5
    %536 = vperm.xlu0 %535, %v43
    %v537 = vpop.permute.xlu0 %536
    %539 = vset.pattern.permute.xlu0 5
    %540 = vperm.xlu0 %539, %v44
    %v541 = vpop.permute.xlu0 %540
    %543 = vset.pattern.permute.xlu0 5
    %544 = vperm.xlu0 %543, %v45
    %v545 = vpop.permute.xlu0 %544
    %547 = vset.pattern.permute.xlu0 5
    %548 = vperm.xlu0 %547, %v46
    %v549 = vpop.permute.xlu0 %548
    %v551 = vmul.f32 %v488, %v521
    %v552 = vmul.f32 %v490, %v525
    %v553 = vmul.f32 %v492, %v529
    %v554 = vmul.f32 %v494, %v533
    %v555 = vmul.f32 %v496, %v537
    %v556 = vmul.f32 %v498, %v541
    %v557 = vmul.f32 %v500, %v545
    %v558 = vmul.f32 %v502, %v549
    %v559 = vmul.f32 %v504, %v521
    %v560 = vmul.f32 %v506, %v525
    %v561 = vmul.f32 %v508, %v529
    %v562 = vmul.f32 %v510, %v533
    %v563 = vmul.f32 %v512, %v537
    %v564 = vmul.f32 %v514, %v541
    %v565 = vmul.f32 %v516, %v545
    %v566 = vmul.f32 %v518, %v549
    %v567 = vadd.f32 %v471, %v551
    %v568 = vadd.f32 %v472, %v552
    %v569 = vadd.f32 %v473, %v553
    %v570 = vadd.f32 %v474, %v554
    %v571 = vadd.f32 %v475, %v555
    %v572 = vadd.f32 %v476, %v556
    %v573 = vadd.f32 %v477, %v557
    %v574 = vadd.f32 %v478, %v558
    %v575 = vadd.f32 %v479, %v559
    %v576 = vadd.f32 %v480, %v560
    %v577 = vadd.f32 %v481, %v561
    %v578 = vadd.f32 %v482, %v562
    %v579 = vadd.f32 %v483, %v563
    %v580 = vadd.f32 %v484, %v564
    %v581 = vadd.f32 %v485, %v565
    %v582 = vadd.f32 %v486, %v566
    %583 = vrot.lane.b32.xlu0 %v15, 125
    %v584 = vpop.permute.xlu0 %583
    %585 = vrot.lane.b32.xlu0 %v16, 125
    %v586 = vpop.permute.xlu0 %585
    %587 = vrot.lane.b32.xlu0 %v17, 125
    %v588 = vpop.permute.xlu0 %587
    %589 = vrot.lane.b32.xlu0 %v18, 125
    %v590 = vpop.permute.xlu0 %589
    %591 = vrot.lane.b32.xlu0 %v19, 125
    %v592 = vpop.permute.xlu0 %591
    %593 = vrot.lane.b32.xlu0 %v20, 125
    %v594 = vpop.permute.xlu0 %593
    %595 = vrot.lane.b32.xlu0 %v21, 125
    %v596 = vpop.permute.xlu0 %595
    %597 = vrot.lane.b32.xlu0 %v22, 125
    %v598 = vpop.permute.xlu0 %597
    %599 = vrot.lane.b32.xlu0 %v23, 125
    %v600 = vpop.permute.xlu0 %599
    %601 = vrot.lane.b32.xlu0 %v24, 125
    %v602 = vpop.permute.xlu0 %601
    %603 = vrot.lane.b32.xlu0 %v25, 125
    %v604 = vpop.permute.xlu0 %603
    %605 = vrot.lane.b32.xlu0 %v26, 125
    %v606 = vpop.permute.xlu0 %605
    %607 = vrot.lane.b32.xlu0 %v27, 125
    %v608 = vpop.permute.xlu0 %607
    %609 = vrot.lane.b32.xlu0 %v28, 125
    %v610 = vpop.permute.xlu0 %609
    %611 = vrot.lane.b32.xlu0 %v29, 125
    %v612 = vpop.permute.xlu0 %611
    %613 = vrot.lane.b32.xlu0 %v30, 125
    %v614 = vpop.permute.xlu0 %613
    %615 = vset.pattern.permute.xlu0 6
    %616 = vperm.xlu0 %615, %v39
    %v617 = vpop.permute.xlu0 %616
    %619 = vset.pattern.permute.xlu0 6
    %620 = vperm.xlu0 %619, %v40
    %v621 = vpop.permute.xlu0 %620
    %623 = vset.pattern.permute.xlu0 6
    %624 = vperm.xlu0 %623, %v41
    %v625 = vpop.permute.xlu0 %624
    %627 = vset.pattern.permute.xlu0 6
    %628 = vperm.xlu0 %627, %v42
    %v629 = vpop.permute.xlu0 %628
    %631 = vset.pattern.permute.xlu0 6
    %632 = vperm.xlu0 %631, %v43
    %v633 = vpop.permute.xlu0 %632
    %635 = vset.pattern.permute.xlu0 6
    %636 = vperm.xlu0 %635, %v44
    %v637 = vpop.permute.xlu0 %636
    %639 = vset.pattern.permute.xlu0 6
    %640 = vperm.xlu0 %639, %v45
    %v641 = vpop.permute.xlu0 %640
    %643 = vset.pattern.permute.xlu0 6
    %644 = vperm.xlu0 %643, %v46
    %v645 = vpop.permute.xlu0 %644
    %v647 = vmul.f32 %v584, %v617
    %v648 = vmul.f32 %v586, %v621
    %v649 = vmul.f32 %v588, %v625
    %v650 = vmul.f32 %v590, %v629
    %v651 = vmul.f32 %v592, %v633
    %v652 = vmul.f32 %v594, %v637
    %v653 = vmul.f32 %v596, %v641
    %v654 = vmul.f32 %v598, %v645
    %v655 = vmul.f32 %v600, %v617
    %v656 = vmul.f32 %v602, %v621
    %v657 = vmul.f32 %v604, %v625
    %v658 = vmul.f32 %v606, %v629
    %v659 = vmul.f32 %v608, %v633
    %v660 = vmul.f32 %v610, %v637
    %v661 = vmul.f32 %v612, %v641
    %v662 = vmul.f32 %v614, %v645
    %v663 = vadd.f32 %v567, %v647
    %v664 = vadd.f32 %v568, %v648
    %v665 = vadd.f32 %v569, %v649
    %v666 = vadd.f32 %v570, %v650
    %v667 = vadd.f32 %v571, %v651
    %v668 = vadd.f32 %v572, %v652
    %v669 = vadd.f32 %v573, %v653
    %v670 = vadd.f32 %v574, %v654
    %v671 = vadd.f32 %v575, %v655
    %v672 = vadd.f32 %v576, %v656
    %v673 = vadd.f32 %v577, %v657
    %v674 = vadd.f32 %v578, %v658
    %v675 = vadd.f32 %v579, %v659
    %v676 = vadd.f32 %v580, %v660
    %v677 = vadd.f32 %v581, %v661
    %v678 = vadd.f32 %v582, %v662
    %680 = vset.pattern.permute.xlu0 0
    %681 = vperm.xlu0 %680, %v31
    %v682 = vpop.permute.xlu0 %681
    %685 = vset.pattern.permute.xlu0 0
    %686 = vperm.xlu0 %685, %v32
    %v687 = vpop.permute.xlu0 %686
    %690 = vset.pattern.permute.xlu0 0
    %691 = vperm.xlu0 %690, %v33
    %v692 = vpop.permute.xlu0 %691
    %695 = vset.pattern.permute.xlu0 0
    %696 = vperm.xlu0 %695, %v34
    %v697 = vpop.permute.xlu0 %696
    %700 = vset.pattern.permute.xlu0 0
    %701 = vperm.xlu0 %700, %v35
    %v702 = vpop.permute.xlu0 %701
    %705 = vset.pattern.permute.xlu0 0
    %706 = vperm.xlu0 %705, %v36
    %v707 = vpop.permute.xlu0 %706
    %710 = vset.pattern.permute.xlu0 0
    %711 = vperm.xlu0 %710, %v37
    %v712 = vpop.permute.xlu0 %711
    %715 = vset.pattern.permute.xlu0 0
    %716 = vperm.xlu0 %715, %v38
    %v717 = vpop.permute.xlu0 %716
    %v719 = vadd.f32 %v663, %v682
    %v720 = vadd.f32 %v664, %v687
    %v721 = vadd.f32 %v665, %v692
    %v722 = vadd.f32 %v666, %v697
    %v723 = vadd.f32 %v667, %v702
    %v724 = vadd.f32 %v668, %v707
    %v725 = vadd.f32 %v669, %v712
    %v726 = vadd.f32 %v670, %v717
    %v727 = vadd.f32 %v671, %v682
    %v728 = vadd.f32 %v672, %v687
    %v729 = vadd.f32 %v673, %v692
    %v730 = vadd.f32 %v674, %v697
    %v731 = vadd.f32 %v675, %v702
    %v732 = vadd.f32 %v676, %v707
    %v733 = vadd.f32 %v677, %v712
    %v734 = vadd.f32 %v678, %v717
    %735 = vst [vmem:[#allocation2] sm:$0xff] %v719
    %736 = vst [vmem:[#allocation2 + $0x8] sm:$0xff] %v720
    %737 = vst [vmem:[#allocation2 + $0x10] sm:$0xff] %v721
    %738 = vst [vmem:[#allocation2 + $0x18] sm:$0xff] %v722
    %739 = vst [vmem:[#allocation2 + $0x20] sm:$0xff] %v723
    %740 = vst [vmem:[#allocation2 + $0x28] sm:$0xff] %v724
    %741 = vst [vmem:[#allocation2 + $0x30] sm:$0xff] %v725
    %742 = vst [vmem:[#allocation2 + $0x38] sm:$0xff] %v726
    %743 = vst [vmem:[#allocation2 + $0x40] sm:$0xff] %v727
    %744 = vst [vmem:[#allocation2 + $0x48] sm:$0xff] %v728
    %745 = vst [vmem:[#allocation2 + $0x50] sm:$0xff] %v729
    %746 = vst [vmem:[#allocation2 + $0x58] sm:$0xff] %v730
    %747 = vst [vmem:[#allocation2 + $0x60] sm:$0xff] %v731
    %748 = vst [vmem:[#allocation2 + $0x68] sm:$0xff] %v732
    %749 = vst [vmem:[#allocation2 + $0x70] sm:$0xff] %v733
    %750 = vst [vmem:[#allocation2 + $0x78] sm:$0xff] %v734
    %767 = vrot.lane.b32.xlu0 %v15, 3
    %v768 = vpop.permute.xlu0 %767
    %769 = vrot.lane.b32.xlu0 %v16, 3
    %v770 = vpop.permute.xlu0 %769
    %771 = vrot.lane.b32.xlu0 %v17, 3
    %v772 = vpop.permute.xlu0 %771
    %773 = vrot.lane.b32.xlu0 %v18, 3
    %v774 = vpop.permute.xlu0 %773
    %775 = vrot.lane.b32.xlu0 %v19, 3
    %v776 = vpop.permute.xlu0 %775
    %777 = vrot.lane.b32.xlu0 %v20, 3
    %v778 = vpop.permute.xlu0 %777
    %779 = vrot.lane.b32.xlu0 %v21, 3
    %v780 = vpop.permute.xlu0 %779
    %781 = vrot.lane.b32.xlu0 %v22, 3
    %v782 = vpop.permute.xlu0 %781
    %783 = vrot.lane.b32.xlu0 %v23, 3
    %v784 = vpop.permute.xlu0 %783
    %785 = vrot.lane.b32.xlu0 %v24, 3
    %v786 = vpop.permute.xlu0 %785
    %787 = vrot.lane.b32.xlu0 %v25, 3
    %v788 = vpop.permute.xlu0 %787
    %789 = vrot.lane.b32.xlu0 %v26, 3
    %v790 = vpop.permute.xlu0 %789
    %791 = vrot.lane.b32.xlu0 %v27, 3
    %v792 = vpop.permute.xlu0 %791
    %793 = vrot.lane.b32.xlu0 %v28, 3
    %v794 = vpop.permute.xlu0 %793
    %795 = vrot.lane.b32.xlu0 %v29, 3
    %v796 = vpop.permute.xlu0 %795
    %797 = vrot.lane.b32.xlu0 %v30, 3
    %v798 = vpop.permute.xlu0 %797
    %vm815 = vcmask 23552
    %v816 = vsel %vm815, 0.0, %v768
    %v817 = vsel %vm815, 0.0, %v770
    %v818 = vsel %vm815, 0.0, %v772
    %v819 = vsel %vm815, 0.0, %v774
    %v820 = vsel %vm815, 0.0, %v776
    %v821 = vsel %vm815, 0.0, %v778
    %v822 = vsel %vm815, 0.0, %v780
    %v823 = vsel %vm815, 0.0, %v782
    %v824 = vsel %vm815, 0.0, %v784
    %v825 = vsel %vm815, 0.0, %v786
    %v826 = vsel %vm815, 0.0, %v788
    %v827 = vsel %vm815, 0.0, %v790
    %v828 = vsel %vm815, 0.0, %v792
    %v829 = vsel %vm815, 0.0, %v794
    %v830 = vsel %vm815, 0.0, %v796
    %v831 = vsel %vm815, 0.0, %v798
    %v832 = vmul.f32 %v816, %v82
    %v833 = vmul.f32 %v817, %v87
    %v834 = vmul.f32 %v818, %v92
    %v835 = vmul.f32 %v819, %v97
    %v836 = vmul.f32 %v820, %v102
    %v837 = vmul.f32 %v821, %v107
    %v838 = vmul.f32 %v822, %v112
    %v839 = vmul.f32 %v823, %v117
    %v840 = vmul.f32 %v824, %v82
    %v841 = vmul.f32 %v825, %v87
    %v842 = vmul.f32 %v826, %v92
    %v843 = vmul.f32 %v827, %v97
    %v844 = vmul.f32 %v828, %v102
    %v845 = vmul.f32 %v829, %v107
    %v846 = vmul.f32 %v830, %v112
    %v847 = vmul.f32 %v831, %v117
    %v848 = vmul.f32 %v816, %v169
    %v849 = vmul.f32 %v817, %v173
    %v850 = vmul.f32 %v818, %v177
    %v851 = vmul.f32 %v819, %v181
    %v852 = vmul.f32 %v820, %v185
    %v853 = vmul.f32 %v821, %v189
    %v854 = vmul.f32 %v822, %v193
    %v855 = vmul.f32 %v823, %v197
    %v856 = vmul.f32 %v824, %v169
    %v857 = vmul.f32 %v825, %v173
    %v858 = vmul.f32 %v826, %v177
    %v859 = vmul.f32 %v827, %v181
    %v860 = vmul.f32 %v828, %v185
    %v861 = vmul.f32 %v829, %v189
    %v862 = vmul.f32 %v830, %v193
    %v863 = vmul.f32 %v831, %v197
    %880 = vrot.lane.b32.xlu0 %v848, 127
    %v881 = vpop.permute.xlu0 %880
    %882 = vrot.lane.b32.xlu0 %v849, 127
    %v883 = vpop.permute.xlu0 %882
    %884 = vrot.lane.b32.xlu0 %v850, 127
    %v885 = vpop.permute.xlu0 %884
    %886 = vrot.lane.b32.xlu0 %v851, 127
    %v887 = vpop.permute.xlu0 %886
    %888 = vrot.lane.b32.xlu0 %v852, 127
    %v889 = vpop.permute.xlu0 %888
    %890 = vrot.lane.b32.xlu0 %v853, 127
    %v891 = vpop.permute.xlu0 %890
    %892 = vrot.lane.b32.xlu0 %v854, 127
    %v893 = vpop.permute.xlu0 %892
    %894 = vrot.lane.b32.xlu0 %v855, 127
    %v895 = vpop.permute.xlu0 %894
    %896 = vrot.lane.b32.xlu0 %v856, 127
    %v897 = vpop.permute.xlu0 %896
    %898 = vrot.lane.b32.xlu0 %v857, 127
    %v899 = vpop.permute.xlu0 %898
    %900 = vrot.lane.b32.xlu0 %v858, 127
    %v901 = vpop.permute.xlu0 %900
    %902 = vrot.lane.b32.xlu0 %v859, 127
    %v903 = vpop.permute.xlu0 %902
    %904 = vrot.lane.b32.xlu0 %v860, 127
    %v905 = vpop.permute.xlu0 %904
    %906 = vrot.lane.b32.xlu0 %v861, 127
    %v907 = vpop.permute.xlu0 %906
    %908 = vrot.lane.b32.xlu0 %v862, 127
    %v909 = vpop.permute.xlu0 %908
    %910 = vrot.lane.b32.xlu0 %v863, 127
    %v911 = vpop.permute.xlu0 %910
    %v928 = vadd.f32 %v832, %v881
    %v929 = vadd.f32 %v833, %v883
    %v930 = vadd.f32 %v834, %v885
    %v931 = vadd.f32 %v835, %v887
    %v932 = vadd.f32 %v836, %v889
    %v933 = vadd.f32 %v837, %v891
    %v934 = vadd.f32 %v838, %v893
    %v935 = vadd.f32 %v839, %v895
    %v936 = vadd.f32 %v840, %v897
    %v937 = vadd.f32 %v841, %v899
    %v938 = vadd.f32 %v842, %v901
    %v939 = vadd.f32 %v843, %v903
    %v940 = vadd.f32 %v844, %v905
    %v941 = vadd.f32 %v845, %v907
    %v942 = vadd.f32 %v846, %v909
    %v943 = vadd.f32 %v847, %v911
    %v944 = vmul.f32 %v816, %v265
    %v945 = vmul.f32 %v817, %v269
    %v946 = vmul.f32 %v818, %v273
    %v947 = vmul.f32 %v819, %v277
    %v948 = vmul.f32 %v820, %v281
    %v949 = vmul.f32 %v821, %v285
    %v950 = vmul.f32 %v822, %v289
    %v951 = vmul.f32 %v823, %v293
    %v952 = vmul.f32 %v824, %v265
    %v953 = vmul.f32 %v825, %v269
    %v954 = vmul.f32 %v826, %v273
    %v955 = vmul.f32 %v827, %v277
    %v956 = vmul.f32 %v828, %v281
    %v957 = vmul.f32 %v829, %v285
    %v958 = vmul.f32 %v830, %v289
    %v959 = vmul.f32 %v831, %v293
    %976 = vrot.lane.b32.xlu0 %v944, 126
    %v977 = vpop.permute.xlu0 %976
    %978 = vrot.lane.b32.xlu0 %v945, 126
    %v979 = vpop.permute.xlu0 %978
    %980 = vrot.lane.b32.xlu0 %v946, 126
    %v981 = vpop.permute.xlu0 %980
    %982 = vrot.lane.b32.xlu0 %v947, 126
    %v983 = vpop.permute.xlu0 %982
    %984 = vrot.lane.b32.xlu0 %v948, 126
    %v985 = vpop.permute.xlu0 %984
    %986 = vrot.lane.b32.xlu0 %v949, 126
    %v987 = vpop.permute.xlu0 %986
    %988 = vrot.lane.b32.xlu0 %v950, 126
    %v989 = vpop.permute.xlu0 %988
    %990 = vrot.lane.b32.xlu0 %v951, 126
    %v991 = vpop.permute.xlu0 %990
    %992 = vrot.lane.b32.xlu0 %v952, 126
    %v993 = vpop.permute.xlu0 %992
    %994 = vrot.lane.b32.xlu0 %v953, 126
    %v995 = vpop.permute.xlu0 %994
    %996 = vrot.lane.b32.xlu0 %v954, 126
    %v997 = vpop.permute.xlu0 %996
    %998 = vrot.lane.b32.xlu0 %v955, 126
    %v999 = vpop.permute.xlu0 %998
    %1000 = vrot.lane.b32.xlu0 %v956, 126
    %v1001 = vpop.permute.xlu0 %1000
    %1002 = vrot.lane.b32.xlu0 %v957, 126
    %v1003 = vpop.permute.xlu0 %1002
    %1004 = vrot.lane.b32.xlu0 %v958, 126
    %v1005 = vpop.permute.xlu0 %1004
    %1006 = vrot.lane.b32.xlu0 %v959, 126
    %v1007 = vpop.permute.xlu0 %1006
    %v1024 = vadd.f32 %v928, %v977
    %v1025 = vadd.f32 %v929, %v979
    %v1026 = vadd.f32 %v930, %v981
    %v1027 = vadd.f32 %v931, %v983
    %v1028 = vadd.f32 %v932, %v985
    %v1029 = vadd.f32 %v933, %v987
    %v1030 = vadd.f32 %v934, %v989
    %v1031 = vadd.f32 %v935, %v991
    %v1032 = vadd.f32 %v936, %v993
    %v1033 = vadd.f32 %v937, %v995
    %v1034 = vadd.f32 %v938, %v997
    %v1035 = vadd.f32 %v939, %v999
    %v1036 = vadd.f32 %v940, %v1001
    %v1037 = vadd.f32 %v941, %v1003
    %v1038 = vadd.f32 %v942, %v1005
    %v1039 = vadd.f32 %v943, %v1007
    %v1040 = vmul.f32 %v816, %v329
    %v1041 = vmul.f32 %v817, %v333
    %v1042 = vmul.f32 %v818, %v337
    %v1043 = vmul.f32 %v819, %v341
    %v1044 = vmul.f32 %v820, %v345
    %v1045 = vmul.f32 %v821, %v349
    %v1046 = vmul.f32 %v822, %v353
    %v1047 = vmul.f32 %v823, %v357
    %v1048 = vmul.f32 %v824, %v329
    %v1049 = vmul.f32 %v825, %v333
    %v1050 = vmul.f32 %v826, %v337
    %v1051 = vmul.f32 %v827, %v341
    %v1052 = vmul.f32 %v828, %v345
    %v1053 = vmul.f32 %v829, %v349
    %v1054 = vmul.f32 %v830, %v353
    %v1055 = vmul.f32 %v831, %v357
    %1072 = vrot.lane.b32.xlu0 %v1040, 125
    %v1073 = vpop.permute.xlu0 %1072
    %1074 = vrot.lane.b32.xlu0 %v1041, 125
    %v1075 = vpop.permute.xlu0 %1074
    %1076 = vrot.lane.b32.xlu0 %v1042, 125
    %v1077 = vpop.permute.xlu0 %1076
    %1078 = vrot.lane.b32.xlu0 %v1043, 125
    %v1079 = vpop.permute.xlu0 %1078
    %1080 = vrot.lane.b32.xlu0 %v1044, 125
    %v1081 = vpop.permute.xlu0 %1080
    %1082 = vrot.lane.b32.xlu0 %v1045, 125
    %v1083 = vpop.permute.xlu0 %1082
    %1084 = vrot.lane.b32.xlu0 %v1046, 125
    %v1085 = vpop.permute.xlu0 %1084
    %1086 = vrot.lane.b32.xlu0 %v1047, 125
    %v1087 = vpop.permute.xlu0 %1086
    %1088 = vrot.lane.b32.xlu0 %v1048, 125
    %v1089 = vpop.permute.xlu0 %1088
    %1090 = vrot.lane.b32.xlu0 %v1049, 125
    %v1091 = vpop.permute.xlu0 %1090
    %1092 = vrot.lane.b32.xlu0 %v1050, 125
    %v1093 = vpop.permute.xlu0 %1092
    %1094 = vrot.lane.b32.xlu0 %v1051, 125
    %v1095 = vpop.permute.xlu0 %1094
    %1096 = vrot.lane.b32.xlu0 %v1052, 125
    %v1097 = vpop.permute.xlu0 %1096
    %1098 = vrot.lane.b32.xlu0 %v1053, 125
    %v1099 = vpop.permute.xlu0 %1098
    %1100 = vrot.lane.b32.xlu0 %v1054, 125
    %v1101 = vpop.permute.xlu0 %1100
    %1102 = vrot.lane.b32.xlu0 %v1055, 125
    %v1103 = vpop.permute.xlu0 %1102
    %v1120 = vadd.f32 %v1024, %v1073
    %v1121 = vadd.f32 %v1025, %v1075
    %v1122 = vadd.f32 %v1026, %v1077
    %v1123 = vadd.f32 %v1027, %v1079
    %v1124 = vadd.f32 %v1028, %v1081
    %v1125 = vadd.f32 %v1029, %v1083
    %v1126 = vadd.f32 %v1030, %v1085
    %v1127 = vadd.f32 %v1031, %v1087
    %v1128 = vadd.f32 %v1032, %v1089
    %v1129 = vadd.f32 %v1033, %v1091
    %v1130 = vadd.f32 %v1034, %v1093
    %v1131 = vadd.f32 %v1035, %v1095
    %v1132 = vadd.f32 %v1036, %v1097
    %v1133 = vadd.f32 %v1037, %v1099
    %v1134 = vadd.f32 %v1038, %v1101
    %v1135 = vadd.f32 %v1039, %v1103
    %v1136 = vmul.f32 %v816, %v425
    %v1137 = vmul.f32 %v817, %v429
    %v1138 = vmul.f32 %v818, %v433
    %v1139 = vmul.f32 %v819, %v437
    %v1140 = vmul.f32 %v820, %v441
    %v1141 = vmul.f32 %v821, %v445
    %v1142 = vmul.f32 %v822, %v449
    %v1143 = vmul.f32 %v823, %v453
    %v1144 = vmul.f32 %v824, %v425
    %v1145 = vmul.f32 %v825, %v429
    %v1146 = vmul.f32 %v826, %v433
    %v1147 = vmul.f32 %v827, %v437
    %v1148 = vmul.f32 %v828, %v441
    %v1149 = vmul.f32 %v829, %v445
    %v1150 = vmul.f32 %v830, %v449
    %v1151 = vmul.f32 %v831, %v453
    %1168 = vrot.lane.b32.xlu0 %v1136, 124
    %v1169 = vpop.permute.xlu0 %1168
    %1170 = vrot.lane.b32.xlu0 %v1137, 124
    %v1171 = vpop.permute.xlu0 %1170
    %1172 = vrot.lane.b32.xlu0 %v1138, 124
    %v1173 = vpop.permute.xlu0 %1172
    %1174 = vrot.lane.b32.xlu0 %v1139, 124
    %v1175 = vpop.permute.xlu0 %1174
    %1176 = vrot.lane.b32.xlu0 %v1140, 124
    %v1177 = vpop.permute.xlu0 %1176
    %1178 = vrot.lane.b32.xlu0 %v1141, 124
    %v1179 = vpop.permute.xlu0 %1178
    %1180 = vrot.lane.b32.xlu0 %v1142, 124
    %v1181 = vpop.permute.xlu0 %1180
    %1182 = vrot.lane.b32.xlu0 %v1143, 124
    %v1183 = vpop.permute.xlu0 %1182
    %1184 = vrot.lane.b32.xlu0 %v1144, 124
    %v1185 = vpop.permute.xlu0 %1184
    %1186 = vrot.lane.b32.xlu0 %v1145, 124
    %v1187 = vpop.permute.xlu0 %1186
    %1188 = vrot.lane.b32.xlu0 %v1146, 124
    %v1189 = vpop.permute.xlu0 %1188
    %1190 = vrot.lane.b32.xlu0 %v1147, 124
    %v1191 = vpop.permute.xlu0 %1190
    %1192 = vrot.lane.b32.xlu0 %v1148, 124
    %v1193 = vpop.permute.xlu0 %1192
    %1194 = vrot.lane.b32.xlu0 %v1149, 124
    %v1195 = vpop.permute.xlu0 %1194
    %1196 = vrot.lane.b32.xlu0 %v1150, 124
    %v1197 = vpop.permute.xlu0 %1196
    %1198 = vrot.lane.b32.xlu0 %v1151, 124
    %v1199 = vpop.permute.xlu0 %1198
    %v1216 = vadd.f32 %v1120, %v1169
    %v1217 = vadd.f32 %v1121, %v1171
    %v1218 = vadd.f32 %v1122, %v1173
    %v1219 = vadd.f32 %v1123, %v1175
    %v1220 = vadd.f32 %v1124, %v1177
    %v1221 = vadd.f32 %v1125, %v1179
    %v1222 = vadd.f32 %v1126, %v1181
    %v1223 = vadd.f32 %v1127, %v1183
    %v1224 = vadd.f32 %v1128, %v1185
    %v1225 = vadd.f32 %v1129, %v1187
    %v1226 = vadd.f32 %v1130, %v1189
    %v1227 = vadd.f32 %v1131, %v1191
    %v1228 = vadd.f32 %v1132, %v1193
    %v1229 = vadd.f32 %v1133, %v1195
    %v1230 = vadd.f32 %v1134, %v1197
    %v1231 = vadd.f32 %v1135, %v1199
    %v1232 = vmul.f32 %v816, %v521
    %v1233 = vmul.f32 %v817, %v525
    %v1234 = vmul.f32 %v818, %v529
    %v1235 = vmul.f32 %v819, %v533
    %v1236 = vmul.f32 %v820, %v537
    %v1237 = vmul.f32 %v821, %v541
    %v1238 = vmul.f32 %v822, %v545
    %v1239 = vmul.f32 %v823, %v549
    %v1240 = vmul.f32 %v824, %v521
    %v1241 = vmul.f32 %v825, %v525
    %v1242 = vmul.f32 %v826, %v529
    %v1243 = vmul.f32 %v827, %v533
    %v1244 = vmul.f32 %v828, %v537
    %v1245 = vmul.f32 %v829, %v541
    %v1246 = vmul.f32 %v830, %v545
    %v1247 = vmul.f32 %v831, %v549
    %1264 = vrot.lane.b32.xlu0 %v1232, 123
    %v1265 = vpop.permute.xlu0 %1264
    %1266 = vrot.lane.b32.xlu0 %v1233, 123
    %v1267 = vpop.permute.xlu0 %1266
    %1268 = vrot.lane.b32.xlu0 %v1234, 123
    %v1269 = vpop.permute.xlu0 %1268
    %1270 = vrot.lane.b32.xlu0 %v1235, 123
    %v1271 = vpop.permute.xlu0 %1270
    %1272 = vrot.lane.b32.xlu0 %v1236, 123
    %v1273 = vpop.permute.xlu0 %1272
    %1274 = vrot.lane.b32.xlu0 %v1237, 123
    %v1275 = vpop.permute.xlu0 %1274
    %1276 = vrot.lane.b32.xlu0 %v1238, 123
    %v1277 = vpop.permute.xlu0 %1276
    %1278 = vrot.lane.b32.xlu0 %v1239, 123
    %v1279 = vpop.permute.xlu0 %1278
    %1280 = vrot.lane.b32.xlu0 %v1240, 123
    %v1281 = vpop.permute.xlu0 %1280
    %1282 = vrot.lane.b32.xlu0 %v1241, 123
    %v1283 = vpop.permute.xlu0 %1282
    %1284 = vrot.lane.b32.xlu0 %v1242, 123
    %v1285 = vpop.permute.xlu0 %1284
    %1286 = vrot.lane.b32.xlu0 %v1243, 123
    %v1287 = vpop.permute.xlu0 %1286
    %1288 = vrot.lane.b32.xlu0 %v1244, 123
    %v1289 = vpop.permute.xlu0 %1288
    %1290 = vrot.lane.b32.xlu0 %v1245, 123
    %v1291 = vpop.permute.xlu0 %1290
    %1292 = vrot.lane.b32.xlu0 %v1246, 123
    %v1293 = vpop.permute.xlu0 %1292
    %1294 = vrot.lane.b32.xlu0 %v1247, 123
    %v1295 = vpop.permute.xlu0 %1294
    %v1312 = vadd.f32 %v1216, %v1265
    %v1313 = vadd.f32 %v1217, %v1267
    %v1314 = vadd.f32 %v1218, %v1269
    %v1315 = vadd.f32 %v1219, %v1271
    %v1316 = vadd.f32 %v1220, %v1273
    %v1317 = vadd.f32 %v1221, %v1275
    %v1318 = vadd.f32 %v1222, %v1277
    %v1319 = vadd.f32 %v1223, %v1279
    %v1320 = vadd.f32 %v1224, %v1281
    %v1321 = vadd.f32 %v1225, %v1283
    %v1322 = vadd.f32 %v1226, %v1285
    %v1323 = vadd.f32 %v1227, %v1287
    %v1324 = vadd.f32 %v1228, %v1289
    %v1325 = vadd.f32 %v1229, %v1291
    %v1326 = vadd.f32 %v1230, %v1293
    %v1327 = vadd.f32 %v1231, %v1295
    %v1328 = vmul.f32 %v816, %v617
    %v1329 = vmul.f32 %v817, %v621
    %v1330 = vmul.f32 %v818, %v625
    %v1331 = vmul.f32 %v819, %v629
    %v1332 = vmul.f32 %v820, %v633
    %v1333 = vmul.f32 %v821, %v637
    %v1334 = vmul.f32 %v822, %v641
    %v1335 = vmul.f32 %v823, %v645
    %v1336 = vmul.f32 %v824, %v617
    %v1337 = vmul.f32 %v825, %v621
    %v1338 = vmul.f32 %v826, %v625
    %v1339 = vmul.f32 %v827, %v629
    %v1340 = vmul.f32 %v828, %v633
    %v1341 = vmul.f32 %v829, %v637
    %v1342 = vmul.f32 %v830, %v641
    %v1343 = vmul.f32 %v831, %v645
    %1360 = vrot.lane.b32.xlu0 %v1328, 122
    %v1361 = vpop.permute.xlu0 %1360
    %1362 = vrot.lane.b32.xlu0 %v1329, 122
    %v1363 = vpop.permute.xlu0 %1362
    %1364 = vrot.lane.b32.xlu0 %v1330, 122
    %v1365 = vpop.permute.xlu0 %1364
    %1366 = vrot.lane.b32.xlu0 %v1331, 122
    %v1367 = vpop.permute.xlu0 %1366
    %1368 = vrot.lane.b32.xlu0 %v1332, 122
    %v1369 = vpop.permute.xlu0 %1368
    %1370 = vrot.lane.b32.xlu0 %v1333, 122
    %v1371 = vpop.permute.xlu0 %1370
    %1372 = vrot.lane.b32.xlu0 %v1334, 122
    %v1373 = vpop.permute.xlu0 %1372
    %1374 = vrot.lane.b32.xlu0 %v1335, 122
    %v1375 = vpop.permute.xlu0 %1374
    %1376 = vrot.lane.b32.xlu0 %v1336, 122
    %v1377 = vpop.permute.xlu0 %1376
    %1378 = vrot.lane.b32.xlu0 %v1337, 122
    %v1379 = vpop.permute.xlu0 %1378
    %1380 = vrot.lane.b32.xlu0 %v1338, 122
    %v1381 = vpop.permute.xlu0 %1380
    %1382 = vrot.lane.b32.xlu0 %v1339, 122
    %v1383 = vpop.permute.xlu0 %1382
    %1384 = vrot.lane.b32.xlu0 %v1340, 122
    %v1385 = vpop.permute.xlu0 %1384
    %1386 = vrot.lane.b32.xlu0 %v1341, 122
    %v1387 = vpop.permute.xlu0 %1386
    %1388 = vrot.lane.b32.xlu0 %v1342, 122
    %v1389 = vpop.permute.xlu0 %1388
    %1390 = vrot.lane.b32.xlu0 %v1343, 122
    %v1391 = vpop.permute.xlu0 %1390
    %v1408 = vadd.f32 %v1312, %v1361
    %v1409 = vadd.f32 %v1313, %v1363
    %v1410 = vadd.f32 %v1314, %v1365
    %v1411 = vadd.f32 %v1315, %v1367
    %v1412 = vadd.f32 %v1316, %v1369
    %v1413 = vadd.f32 %v1317, %v1371
    %v1414 = vadd.f32 %v1318, %v1373
    %v1415 = vadd.f32 %v1319, %v1375
    %v1416 = vadd.f32 %v1320, %v1377
    %v1417 = vadd.f32 %v1321, %v1379
    %v1418 = vadd.f32 %v1322, %v1381
    %v1419 = vadd.f32 %v1323, %v1383
    %v1420 = vadd.f32 %v1324, %v1385
    %v1421 = vadd.f32 %v1325, %v1387
    %v1422 = vadd.f32 %v1326, %v1389
    %v1423 = vadd.f32 %v1327, %v1391
    %v1424 = vadd.f32 %v1408, %v682
    %v1425 = vadd.f32 %v1409, %v687
    %v1426 = vadd.f32 %v1410, %v692
    %v1427 = vadd.f32 %v1411, %v697
    %v1428 = vadd.f32 %v1412, %v702
    %v1429 = vadd.f32 %v1413, %v707
    %v1430 = vadd.f32 %v1414, %v712
    %v1431 = vadd.f32 %v1415, %v717
    %v1432 = vadd.f32 %v1416, %v682
    %v1433 = vadd.f32 %v1417, %v687
    %v1434 = vadd.f32 %v1418, %v692
    %v1435 = vadd.f32 %v1419, %v697
    %v1436 = vadd.f32 %v1420, %v702
    %v1437 = vadd.f32 %v1421, %v707
    %v1438 = vadd.f32 %v1422, %v712
    %v1439 = vadd.f32 %v1423, %v717
    %1440 = vst.msk [vmem:[#allocation2] sm:$0xff] %vm815, %v1424
    %1441 = vst.msk [vmem:[#allocation2 + $0x8] sm:$0xff] %vm815, %v1425
    %1442 = vst.msk [vmem:[#allocation2 + $0x10] sm:$0xff] %vm815, %v1426
    %1443 = vst.msk [vmem:[#allocation2 + $0x18] sm:$0xff] %vm815, %v1427
    %1444 = vst.msk [vmem:[#allocation2 + $0x20] sm:$0xff] %vm815, %v1428
    %1445 = vst.msk [vmem:[#allocation2 + $0x28] sm:$0xff] %vm815, %v1429
    %1446 = vst.msk [vmem:[#allocation2 + $0x30] sm:$0xff] %vm815, %v1430
    %1447 = vst.msk [vmem:[#allocation2 + $0x38] sm:$0xff] %vm815, %v1431
    %1448 = vst.msk [vmem:[#allocation2 + $0x40] sm:$0xff] %vm815, %v1432
    %1449 = vst.msk [vmem:[#allocation2 + $0x48] sm:$0xff] %vm815, %v1433
    %1450 = vst.msk [vmem:[#allocation2 + $0x50] sm:$0xff] %vm815, %v1434
    %1451 = vst.msk [vmem:[#allocation2 + $0x58] sm:$0xff] %vm815, %v1435
    %1452 = vst.msk [vmem:[#allocation2 + $0x60] sm:$0xff] %vm815, %v1436
    %1453 = vst.msk [vmem:[#allocation2 + $0x68] sm:$0xff] %vm815, %v1437
    %1454 = vst.msk [vmem:[#allocation2 + $0x70] sm:$0xff] %vm815, %v1438
    %1455 = vst.msk [vmem:[#allocation2 + $0x78] sm:$0xff] %vm815, %v1439
    %1456 = vrot.lane.b32.xlu0 %v15, 6
    %v1457 = vpop.permute.xlu0 %1456
    %1458 = vrot.lane.b32.xlu0 %v16, 6
    %v1459 = vpop.permute.xlu0 %1458
    %1460 = vrot.lane.b32.xlu0 %v17, 6
    %v1461 = vpop.permute.xlu0 %1460
    %1462 = vrot.lane.b32.xlu0 %v18, 6
    %v1463 = vpop.permute.xlu0 %1462
    %1464 = vrot.lane.b32.xlu0 %v19, 6
    %v1465 = vpop.permute.xlu0 %1464
    %1466 = vrot.lane.b32.xlu0 %v20, 6
    %v1467 = vpop.permute.xlu0 %1466
    %1468 = vrot.lane.b32.xlu0 %v21, 6
    %v1469 = vpop.permute.xlu0 %1468
    %1470 = vrot.lane.b32.xlu0 %v22, 6
    %v1471 = vpop.permute.xlu0 %1470
    %1472 = vrot.lane.b32.xlu0 %v23, 6
    %v1473 = vpop.permute.xlu0 %1472
    %1474 = vrot.lane.b32.xlu0 %v24, 6
    %v1475 = vpop.permute.xlu0 %1474
    %1476 = vrot.lane.b32.xlu0 %v25, 6
    %v1477 = vpop.permute.xlu0 %1476
    %1478 = vrot.lane.b32.xlu0 %v26, 6
    %v1479 = vpop.permute.xlu0 %1478
    %1480 = vrot.lane.b32.xlu0 %v27, 6
    %v1481 = vpop.permute.xlu0 %1480
    %1482 = vrot.lane.b32.xlu0 %v28, 6
    %v1483 = vpop.permute.xlu0 %1482
    %1484 = vrot.lane.b32.xlu0 %v29, 6
    %v1485 = vpop.permute.xlu0 %1484
    %1486 = vrot.lane.b32.xlu0 %v30, 6
    %v1487 = vpop.permute.xlu0 %1486
    %vm1504 = vcmask 48128
    %v1505 = vsel %vm1504, %v1457, 0.0
    %v1506 = vsel %vm1504, %v1459, 0.0
    %v1507 = vsel %vm1504, %v1461, 0.0
    %v1508 = vsel %vm1504, %v1463, 0.0
    %v1509 = vsel %vm1504, %v1465, 0.0
    %v1510 = vsel %vm1504, %v1467, 0.0
    %v1511 = vsel %vm1504, %v1469, 0.0
    %v1512 = vsel %vm1504, %v1471, 0.0
    %v1513 = vsel %vm1504, %v1473, 0.0
    %v1514 = vsel %vm1504, %v1475, 0.0
    %v1515 = vsel %vm1504, %v1477, 0.0
    %v1516 = vsel %vm1504, %v1479, 0.0
    %v1517 = vsel %vm1504, %v1481, 0.0
    %v1518 = vsel %vm1504, %v1483, 0.0
    %v1519 = vsel %vm1504, %v1485, 0.0
    %v1520 = vsel %vm1504, %v1487, 0.0
    %v1521 = vmul.f32 %v1505, %v82
    %v1522 = vmul.f32 %v1506, %v87
    %v1523 = vmul.f32 %v1507, %v92
    %v1524 = vmul.f32 %v1508, %v97
    %v1525 = vmul.f32 %v1509, %v102
    %v1526 = vmul.f32 %v1510, %v107
    %v1527 = vmul.f32 %v1511, %v112
    %v1528 = vmul.f32 %v1512, %v117
    %v1529 = vmul.f32 %v1513, %v82
    %v1530 = vmul.f32 %v1514, %v87
    %v1531 = vmul.f32 %v1515, %v92
    %v1532 = vmul.f32 %v1516, %v97
    %v1533 = vmul.f32 %v1517, %v102
    %v1534 = vmul.f32 %v1518, %v107
    %v1535 = vmul.f32 %v1519, %v112
    %v1536 = vmul.f32 %v1520, %v117
    %v1537 = vmul.f32 %v1505, %v169
    %v1538 = vmul.f32 %v1506, %v173
    %v1539 = vmul.f32 %v1507, %v177
    %v1540 = vmul.f32 %v1508, %v181
    %v1541 = vmul.f32 %v1509, %v185
    %v1542 = vmul.f32 %v1510, %v189
    %v1543 = vmul.f32 %v1511, %v193
    %v1544 = vmul.f32 %v1512, %v197
    %v1545 = vmul.f32 %v1513, %v169
    %v1546 = vmul.f32 %v1514, %v173
    %v1547 = vmul.f32 %v1515, %v177
    %v1548 = vmul.f32 %v1516, %v181
    %v1549 = vmul.f32 %v1517, %v185
    %v1550 = vmul.f32 %v1518, %v189
    %v1551 = vmul.f32 %v1519, %v193
    %v1552 = vmul.f32 %v1520, %v197
    %1569 = vrot.lane.b32.xlu0 %v1537, 127
    %v1570 = vpop.permute.xlu0 %1569
    %1571 = vrot.lane.b32.xlu0 %v1538, 127
    %v1572 = vpop.permute.xlu0 %1571
    %1573 = vrot.lane.b32.xlu0 %v1539, 127
    %v1574 = vpop.permute.xlu0 %1573
    %1575 = vrot.lane.b32.xlu0 %v1540, 127
    %v1576 = vpop.permute.xlu0 %1575
    %1577 = vrot.lane.b32.xlu0 %v1541, 127
    %v1578 = vpop.permute.xlu0 %1577
    %1579 = vrot.lane.b32.xlu0 %v1542, 127
    %v1580 = vpop.permute.xlu0 %1579
    %1581 = vrot.lane.b32.xlu0 %v1543, 127
    %v1582 = vpop.permute.xlu0 %1581
    %1583 = vrot.lane.b32.xlu0 %v1544, 127
    %v1584 = vpop.permute.xlu0 %1583
    %1585 = vrot.lane.b32.xlu0 %v1545, 127
    %v1586 = vpop.permute.xlu0 %1585
    %1587 = vrot.lane.b32.xlu0 %v1546, 127
    %v1588 = vpop.permute.xlu0 %1587
    %1589 = vrot.lane.b32.xlu0 %v1547, 127
    %v1590 = vpop.permute.xlu0 %1589
    %1591 = vrot.lane.b32.xlu0 %v1548, 127
    %v1592 = vpop.permute.xlu0 %1591
    %1593 = vrot.lane.b32.xlu0 %v1549, 127
    %v1594 = vpop.permute.xlu0 %1593
    %1595 = vrot.lane.b32.xlu0 %v1550, 127
    %v1596 = vpop.permute.xlu0 %1595
    %1597 = vrot.lane.b32.xlu0 %v1551, 127
    %v1598 = vpop.permute.xlu0 %1597
    %1599 = vrot.lane.b32.xlu0 %v1552, 127
    %v1600 = vpop.permute.xlu0 %1599
    %v1617 = vadd.f32 %v1521, %v1570
    %v1618 = vadd.f32 %v1522, %v1572
    %v1619 = vadd.f32 %v1523, %v1574
    %v1620 = vadd.f32 %v1524, %v1576
    %v1621 = vadd.f32 %v1525, %v1578
    %v1622 = vadd.f32 %v1526, %v1580
    %v1623 = vadd.f32 %v1527, %v1582
    %v1624 = vadd.f32 %v1528, %v1584
    %v1625 = vadd.f32 %v1529, %v1586
    %v1626 = vadd.f32 %v1530, %v1588
    %v1627 = vadd.f32 %v1531, %v1590
    %v1628 = vadd.f32 %v1532, %v1592
    %v1629 = vadd.f32 %v1533, %v1594
    %v1630 = vadd.f32 %v1534, %v1596
    %v1631 = vadd.f32 %v1535, %v1598
    %v1632 = vadd.f32 %v1536, %v1600
    %v1633 = vmul.f32 %v1505, %v265
    %v1634 = vmul.f32 %v1506, %v269
    %v1635 = vmul.f32 %v1507, %v273
    %v1636 = vmul.f32 %v1508, %v277
    %v1637 = vmul.f32 %v1509, %v281
    %v1638 = vmul.f32 %v1510, %v285
    %v1639 = vmul.f32 %v1511, %v289
    %v1640 = vmul.f32 %v1512, %v293
    %v1641 = vmul.f32 %v1513, %v265
    %v1642 = vmul.f32 %v1514, %v269
    %v1643 = vmul.f32 %v1515, %v273
    %v1644 = vmul.f32 %v1516, %v277
    %v1645 = vmul.f32 %v1517, %v281
    %v1646 = vmul.f32 %v1518, %v285
    %v1647 = vmul.f32 %v1519, %v289
    %v1648 = vmul.f32 %v1520, %v293
    %1665 = vrot.lane.b32.xlu0 %v1633, 126
    %v1666 = vpop.permute.xlu0 %1665
    %1667 = vrot.lane.b32.xlu0 %v1634, 126
    %v1668 = vpop.permute.xlu0 %1667
    %1669 = vrot.lane.b32.xlu0 %v1635, 126
    %v1670 = vpop.permute.xlu0 %1669
    %1671 = vrot.lane.b32.xlu0 %v1636, 126
    %v1672 = vpop.permute.xlu0 %1671
    %1673 = vrot.lane.b32.xlu0 %v1637, 126
    %v1674 = vpop.permute.xlu0 %1673
    %1675 = vrot.lane.b32.xlu0 %v1638, 126
    %v1676 = vpop.permute.xlu0 %1675
    %1677 = vrot.lane.b32.xlu0 %v1639, 126
    %v1678 = vpop.permute.xlu0 %1677
    %1679 = vrot.lane.b32.xlu0 %v1640, 126
    %v1680 = vpop.permute.xlu0 %1679
    %1681 = vrot.lane.b32.xlu0 %v1641, 126
    %v1682 = vpop.permute.xlu0 %1681
    %1683 = vrot.lane.b32.xlu0 %v1642, 126
    %v1684 = vpop.permute.xlu0 %1683
    %1685 = vrot.lane.b32.xlu0 %v1643, 126
    %v1686 = vpop.permute.xlu0 %1685
    %1687 = vrot.lane.b32.xlu0 %v1644, 126
    %v1688 = vpop.permute.xlu0 %1687
    %1689 = vrot.lane.b32.xlu0 %v1645, 126
    %v1690 = vpop.permute.xlu0 %1689
    %1691 = vrot.lane.b32.xlu0 %v1646, 126
    %v1692 = vpop.permute.xlu0 %1691
    %1693 = vrot.lane.b32.xlu0 %v1647, 126
    %v1694 = vpop.permute.xlu0 %1693
    %1695 = vrot.lane.b32.xlu0 %v1648, 126
    %v1696 = vpop.permute.xlu0 %1695
    %v1713 = vadd.f32 %v1617, %v1666
    %v1714 = vadd.f32 %v1618, %v1668
    %v1715 = vadd.f32 %v1619, %v1670
    %v1716 = vadd.f32 %v1620, %v1672
    %v1717 = vadd.f32 %v1621, %v1674
    %v1718 = vadd.f32 %v1622, %v1676
    %v1719 = vadd.f32 %v1623, %v1678
    %v1720 = vadd.f32 %v1624, %v1680
    %v1721 = vadd.f32 %v1625, %v1682
    %v1722 = vadd.f32 %v1626, %v1684
    %v1723 = vadd.f32 %v1627, %v1686
    %v1724 = vadd.f32 %v1628, %v1688
    %v1725 = vadd.f32 %v1629, %v1690
    %v1726 = vadd.f32 %v1630, %v1692
    %v1727 = vadd.f32 %v1631, %v1694
    %v1728 = vadd.f32 %v1632, %v1696
    %v1729 = vmul.f32 %v1505, %v329
    %v1730 = vmul.f32 %v1506, %v333
    %v1731 = vmul.f32 %v1507, %v337
    %v1732 = vmul.f32 %v1508, %v341
    %v1733 = vmul.f32 %v1509, %v345
    %v1734 = vmul.f32 %v1510, %v349
    %v1735 = vmul.f32 %v1511, %v353
    %v1736 = vmul.f32 %v1512, %v357
    %v1737 = vmul.f32 %v1513, %v329
    %v1738 = vmul.f32 %v1514, %v333
    %v1739 = vmul.f32 %v1515, %v337
    %v1740 = vmul.f32 %v1516, %v341
    %v1741 = vmul.f32 %v1517, %v345
    %v1742 = vmul.f32 %v1518, %v349
    %v1743 = vmul.f32 %v1519, %v353
    %v1744 = vmul.f32 %v1520, %v357
    %1761 = vrot.lane.b32.xlu0 %v1729, 125
    %v1762 = vpop.permute.xlu0 %1761
    %1763 = vrot.lane.b32.xlu0 %v1730, 125
    %v1764 = vpop.permute.xlu0 %1763
    %1765 = vrot.lane.b32.xlu0 %v1731, 125
    %v1766 = vpop.permute.xlu0 %1765
    %1767 = vrot.lane.b32.xlu0 %v1732, 125
    %v1768 = vpop.permute.xlu0 %1767
    %1769 = vrot.lane.b32.xlu0 %v1733, 125
    %v1770 = vpop.permute.xlu0 %1769
    %1771 = vrot.lane.b32.xlu0 %v1734, 125
    %v1772 = vpop.permute.xlu0 %1771
    %1773 = vrot.lane.b32.xlu0 %v1735, 125
    %v1774 = vpop.permute.xlu0 %1773
    %1775 = vrot.lane.b32.xlu0 %v1736, 125
    %v1776 = vpop.permute.xlu0 %1775
    %1777 = vrot.lane.b32.xlu0 %v1737, 125
    %v1778 = vpop.permute.xlu0 %1777
    %1779 = vrot.lane.b32.xlu0 %v1738, 125
    %v1780 = vpop.permute.xlu0 %1779
    %1781 = vrot.lane.b32.xlu0 %v1739, 125
    %v1782 = vpop.permute.xlu0 %1781
    %1783 = vrot.lane.b32.xlu0 %v1740, 125
    %v1784 = vpop.permute.xlu0 %1783
    %1785 = vrot.lane.b32.xlu0 %v1741, 125
    %v1786 = vpop.permute.xlu0 %1785
    %1787 = vrot.lane.b32.xlu0 %v1742, 125
    %v1788 = vpop.permute.xlu0 %1787
    %1789 = vrot.lane.b32.xlu0 %v1743, 125
    %v1790 = vpop.permute.xlu0 %1789
    %1791 = vrot.lane.b32.xlu0 %v1744, 125
    %v1792 = vpop.permute.xlu0 %1791
    %v1809 = vadd.f32 %v1713, %v1762
    %v1810 = vadd.f32 %v1714, %v1764
    %v1811 = vadd.f32 %v1715, %v1766
    %v1812 = vadd.f32 %v1716, %v1768
    %v1813 = vadd.f32 %v1717, %v1770
    %v1814 = vadd.f32 %v1718, %v1772
    %v1815 = vadd.f32 %v1719, %v1774
    %v1816 = vadd.f32 %v1720, %v1776
    %v1817 = vadd.f32 %v1721, %v1778
    %v1818 = vadd.f32 %v1722, %v1780
    %v1819 = vadd.f32 %v1723, %v1782
    %v1820 = vadd.f32 %v1724, %v1784
    %v1821 = vadd.f32 %v1725, %v1786
    %v1822 = vadd.f32 %v1726, %v1788
    %v1823 = vadd.f32 %v1727, %v1790
    %v1824 = vadd.f32 %v1728, %v1792
    %v1825 = vmul.f32 %v1505, %v425
    %v1826 = vmul.f32 %v1506, %v429
    %v1827 = vmul.f32 %v1507, %v433
    %v1828 = vmul.f32 %v1508, %v437
    %v1829 = vmul.f32 %v1509, %v441
    %v1830 = vmul.f32 %v1510, %v445
    %v1831 = vmul.f32 %v1511, %v449
    %v1832 = vmul.f32 %v1512, %v453
    %v1833 = vmul.f32 %v1513, %v425
    %v1834 = vmul.f32 %v1514, %v429
    %v1835 = vmul.f32 %v1515, %v433
    %v1836 = vmul.f32 %v1516, %v437
    %v1837 = vmul.f32 %v1517, %v441
    %v1838 = vmul.f32 %v1518, %v445
    %v1839 = vmul.f32 %v1519, %v449
    %v1840 = vmul.f32 %v1520, %v453
    %1857 = vrot.lane.b32.xlu0 %v1825, 124
    %v1858 = vpop.permute.xlu0 %1857
    %1859 = vrot.lane.b32.xlu0 %v1826, 124
    %v1860 = vpop.permute.xlu0 %1859
    %1861 = vrot.lane.b32.xlu0 %v1827, 124
    %v1862 = vpop.permute.xlu0 %1861
    %1863 = vrot.lane.b32.xlu0 %v1828, 124
    %v1864 = vpop.permute.xlu0 %1863
    %1865 = vrot.lane.b32.xlu0 %v1829, 124
    %v1866 = vpop.permute.xlu0 %1865
    %1867 = vrot.lane.b32.xlu0 %v1830, 124
    %v1868 = vpop.permute.xlu0 %1867
    %1869 = vrot.lane.b32.xlu0 %v1831, 124
    %v1870 = vpop.permute.xlu0 %1869
    %1871 = vrot.lane.b32.xlu0 %v1832, 124
    %v1872 = vpop.permute.xlu0 %1871
    %1873 = vrot.lane.b32.xlu0 %v1833, 124
    %v1874 = vpop.permute.xlu0 %1873
    %1875 = vrot.lane.b32.xlu0 %v1834, 124
    %v1876 = vpop.permute.xlu0 %1875
    %1877 = vrot.lane.b32.xlu0 %v1835, 124
    %v1878 = vpop.permute.xlu0 %1877
    %1879 = vrot.lane.b32.xlu0 %v1836, 124
    %v1880 = vpop.permute.xlu0 %1879
    %1881 = vrot.lane.b32.xlu0 %v1837, 124
    %v1882 = vpop.permute.xlu0 %1881
    %1883 = vrot.lane.b32.xlu0 %v1838, 124
    %v1884 = vpop.permute.xlu0 %1883
    %1885 = vrot.lane.b32.xlu0 %v1839, 124
    %v1886 = vpop.permute.xlu0 %1885
    %1887 = vrot.lane.b32.xlu0 %v1840, 124
    %v1888 = vpop.permute.xlu0 %1887
    %v1905 = vadd.f32 %v1809, %v1858
    %v1906 = vadd.f32 %v1810, %v1860
    %v1907 = vadd.f32 %v1811, %v1862
    %v1908 = vadd.f32 %v1812, %v1864
    %v1909 = vadd.f32 %v1813, %v1866
    %v1910 = vadd.f32 %v1814, %v1868
    %v1911 = vadd.f32 %v1815, %v1870
    %v1912 = vadd.f32 %v1816, %v1872
    %v1913 = vadd.f32 %v1817, %v1874
    %v1914 = vadd.f32 %v1818, %v1876
    %v1915 = vadd.f32 %v1819, %v1878
    %v1916 = vadd.f32 %v1820, %v1880
    %v1917 = vadd.f32 %v1821, %v1882
    %v1918 = vadd.f32 %v1822, %v1884
    %v1919 = vadd.f32 %v1823, %v1886
    %v1920 = vadd.f32 %v1824, %v1888
    %v1921 = vmul.f32 %v1505, %v521
    %v1922 = vmul.f32 %v1506, %v525
    %v1923 = vmul.f32 %v1507, %v529
    %v1924 = vmul.f32 %v1508, %v533
    %v1925 = vmul.f32 %v1509, %v537
    %v1926 = vmul.f32 %v1510, %v541
    %v1927 = vmul.f32 %v1511, %v545
    %v1928 = vmul.f32 %v1512, %v549
    %v1929 = vmul.f32 %v1513, %v521
    %v1930 = vmul.f32 %v1514, %v525
    %v1931 = vmul.f32 %v1515, %v529
    %v1932 = vmul.f32 %v1516, %v533
    %v1933 = vmul.f32 %v1517, %v537
    %v1934 = vmul.f32 %v1518, %v541
    %v1935 = vmul.f32 %v1519, %v545
    %v1936 = vmul.f32 %v1520, %v549
    %1953 = vrot.lane.b32.xlu0 %v1921, 123
    %v1954 = vpop.permute.xlu0 %1953
    %1955 = vrot.lane.b32.xlu0 %v1922, 123
    %v1956 = vpop.permute.xlu0 %1955
    %1957 = vrot.lane.b32.xlu0 %v1923, 123
    %v1958 = vpop.permute.xlu0 %1957
    %1959 = vrot.lane.b32.xlu0 %v1924, 123
    %v1960 = vpop.permute.xlu0 %1959
    %1961 = vrot.lane.b32.xlu0 %v1925, 123
    %v1962 = vpop.permute.xlu0 %1961
    %1963 = vrot.lane.b32.xlu0 %v1926, 123
    %v1964 = vpop.permute.xlu0 %1963
    %1965 = vrot.lane.b32.xlu0 %v1927, 123
    %v1966 = vpop.permute.xlu0 %1965
    %1967 = vrot.lane.b32.xlu0 %v1928, 123
    %v1968 = vpop.permute.xlu0 %1967
    %1969 = vrot.lane.b32.xlu0 %v1929, 123
    %v1970 = vpop.permute.xlu0 %1969
    %1971 = vrot.lane.b32.xlu0 %v1930, 123
    %v1972 = vpop.permute.xlu0 %1971
    %1973 = vrot.lane.b32.xlu0 %v1931, 123
    %v1974 = vpop.permute.xlu0 %1973
    %1975 = vrot.lane.b32.xlu0 %v1932, 123
    %v1976 = vpop.permute.xlu0 %1975
    %1977 = vrot.lane.b32.xlu0 %v1933, 123
    %v1978 = vpop.permute.xlu0 %1977
    %1979 = vrot.lane.b32.xlu0 %v1934, 123
    %v1980 = vpop.permute.xlu0 %1979
    %1981 = vrot.lane.b32.xlu0 %v1935, 123
    %v1982 = vpop.permute.xlu0 %1981
    %1983 = vrot.lane.b32.xlu0 %v1936, 123
    %v1984 = vpop.permute.xlu0 %1983
    %v2001 = vadd.f32 %v1905, %v1954
    %v2002 = vadd.f32 %v1906, %v1956
    %v2003 = vadd.f32 %v1907, %v1958
    %v2004 = vadd.f32 %v1908, %v1960
    %v2005 = vadd.f32 %v1909, %v1962
    %v2006 = vadd.f32 %v1910, %v1964
    %v2007 = vadd.f32 %v1911, %v1966
    %v2008 = vadd.f32 %v1912, %v1968
    %v2009 = vadd.f32 %v1913, %v1970
    %v2010 = vadd.f32 %v1914, %v1972
    %v2011 = vadd.f32 %v1915, %v1974
    %v2012 = vadd.f32 %v1916, %v1976
    %v2013 = vadd.f32 %v1917, %v1978
    %v2014 = vadd.f32 %v1918, %v1980
    %v2015 = vadd.f32 %v1919, %v1982
    %v2016 = vadd.f32 %v1920, %v1984
    %v2017 = vmul.f32 %v1505, %v617
    %v2018 = vmul.f32 %v1506, %v621
    %v2019 = vmul.f32 %v1507, %v625
    %v2020 = vmul.f32 %v1508, %v629
    %v2021 = vmul.f32 %v1509, %v633
    %v2022 = vmul.f32 %v1510, %v637
    %v2023 = vmul.f32 %v1511, %v641
    %v2024 = vmul.f32 %v1512, %v645
    %v2025 = vmul.f32 %v1513, %v617
    %v2026 = vmul.f32 %v1514, %v621
    %v2027 = vmul.f32 %v1515, %v625
    %v2028 = vmul.f32 %v1516, %v629
    %v2029 = vmul.f32 %v1517, %v633
    %v2030 = vmul.f32 %v1518, %v637
    %v2031 = vmul.f32 %v1519, %v641
    %v2032 = vmul.f32 %v1520, %v645
    %2049 = vrot.lane.b32.xlu0 %v2017, 122
    %v2050 = vpop.permute.xlu0 %2049
    %2051 = vrot.lane.b32.xlu0 %v2018, 122
    %v2052 = vpop.permute.xlu0 %2051
    %2053 = vrot.lane.b32.xlu0 %v2019, 122
    %v2054 = vpop.permute.xlu0 %2053
    %2055 = vrot.lane.b32.xlu0 %v2020, 122
    %v2056 = vpop.permute.xlu0 %2055
    %2057 = vrot.lane.b32.xlu0 %v2021, 122
    %v2058 = vpop.permute.xlu0 %2057
    %2059 = vrot.lane.b32.xlu0 %v2022, 122
    %v2060 = vpop.permute.xlu0 %2059
    %2061 = vrot.lane.b32.xlu0 %v2023, 122
    %v2062 = vpop.permute.xlu0 %2061
    %2063 = vrot.lane.b32.xlu0 %v2024, 122
    %v2064 = vpop.permute.xlu0 %2063
    %2065 = vrot.lane.b32.xlu0 %v2025, 122
    %v2066 = vpop.permute.xlu0 %2065
    %2067 = vrot.lane.b32.xlu0 %v2026, 122
    %v2068 = vpop.permute.xlu0 %2067
    %2069 = vrot.lane.b32.xlu0 %v2027, 122
    %v2070 = vpop.permute.xlu0 %2069
    %2071 = vrot.lane.b32.xlu0 %v2028, 122
    %v2072 = vpop.permute.xlu0 %2071
    %2073 = vrot.lane.b32.xlu0 %v2029, 122
    %v2074 = vpop.permute.xlu0 %2073
    %2075 = vrot.lane.b32.xlu0 %v2030, 122
    %v2076 = vpop.permute.xlu0 %2075
    %2077 = vrot.lane.b32.xlu0 %v2031, 122
    %v2078 = vpop.permute.xlu0 %2077
    %2079 = vrot.lane.b32.xlu0 %v2032, 122
    %v2080 = vpop.permute.xlu0 %2079
    %v2097 = vadd.f32 %v2001, %v2050
    %v2098 = vadd.f32 %v2002, %v2052
    %v2099 = vadd.f32 %v2003, %v2054
    %v2100 = vadd.f32 %v2004, %v2056
    %v2101 = vadd.f32 %v2005, %v2058
    %v2102 = vadd.f32 %v2006, %v2060
    %v2103 = vadd.f32 %v2007, %v2062
    %v2104 = vadd.f32 %v2008, %v2064
    %v2105 = vadd.f32 %v2009, %v2066
    %v2106 = vadd.f32 %v2010, %v2068
    %v2107 = vadd.f32 %v2011, %v2070
    %v2108 = vadd.f32 %v2012, %v2072
    %v2109 = vadd.f32 %v2013, %v2074
    %v2110 = vadd.f32 %v2014, %v2076
    %v2111 = vadd.f32 %v2015, %v2078
    %v2112 = vadd.f32 %v2016, %v2080
    %v2113 = vadd.f32 %v2097, %v682
    %v2114 = vadd.f32 %v2098, %v687
    %v2115 = vadd.f32 %v2099, %v692
    %v2116 = vadd.f32 %v2100, %v697
    %v2117 = vadd.f32 %v2101, %v702
    %v2118 = vadd.f32 %v2102, %v707
    %v2119 = vadd.f32 %v2103, %v712
    %v2120 = vadd.f32 %v2104, %v717
    %v2121 = vadd.f32 %v2105, %v682
    %v2122 = vadd.f32 %v2106, %v687
    %v2123 = vadd.f32 %v2107, %v692
    %v2124 = vadd.f32 %v2108, %v697
    %v2125 = vadd.f32 %v2109, %v702
    %v2126 = vadd.f32 %v2110, %v707
    %v2127 = vadd.f32 %v2111, %v712
    %v2128 = vadd.f32 %v2112, %v717
    %2145 = vrot.lane.b32.xlu0 %v2113, 125
    %v2146 = vpop.permute.xlu0 %2145
    %2147 = vrot.lane.b32.xlu0 %v2114, 125
    %v2148 = vpop.permute.xlu0 %2147
    %2149 = vrot.lane.b32.xlu0 %v2115, 125
    %v2150 = vpop.permute.xlu0 %2149
    %2151 = vrot.lane.b32.xlu0 %v2116, 125
    %v2152 = vpop.permute.xlu0 %2151
    %2153 = vrot.lane.b32.xlu0 %v2117, 125
    %v2154 = vpop.permute.xlu0 %2153
    %2155 = vrot.lane.b32.xlu0 %v2118, 125
    %v2156 = vpop.permute.xlu0 %2155
    %2157 = vrot.lane.b32.xlu0 %v2119, 125
    %v2158 = vpop.permute.xlu0 %2157
    %2159 = vrot.lane.b32.xlu0 %v2120, 125
    %v2160 = vpop.permute.xlu0 %2159
    %2161 = vrot.lane.b32.xlu0 %v2121, 125
    %v2162 = vpop.permute.xlu0 %2161
    %2163 = vrot.lane.b32.xlu0 %v2122, 125
    %v2164 = vpop.permute.xlu0 %2163
    %2165 = vrot.lane.b32.xlu0 %v2123, 125
    %v2166 = vpop.permute.xlu0 %2165
    %2167 = vrot.lane.b32.xlu0 %v2124, 125
    %v2168 = vpop.permute.xlu0 %2167
    %2169 = vrot.lane.b32.xlu0 %v2125, 125
    %v2170 = vpop.permute.xlu0 %2169
    %2171 = vrot.lane.b32.xlu0 %v2126, 125
    %v2172 = vpop.permute.xlu0 %2171
    %2173 = vrot.lane.b32.xlu0 %v2127, 125
    %v2174 = vpop.permute.xlu0 %2173
    %2175 = vrot.lane.b32.xlu0 %v2128, 125
    %v2176 = vpop.permute.xlu0 %2175
    %vm2193 = vcmask 1048552
    %2194 = vst.msk [vmem:[#allocation2] sm:$0xff] %vm2193, %v2146
    %2195 = vst.msk [vmem:[#allocation2 + $0x8] sm:$0xff] %vm2193, %v2148
    %2196 = vst.msk [vmem:[#allocation2 + $0x10] sm:$0xff] %vm2193, %v2150
    %2197 = vst.msk [vmem:[#allocation2 + $0x18] sm:$0xff] %vm2193, %v2152
    %2198 = vst.msk [vmem:[#allocation2 + $0x20] sm:$0xff] %vm2193, %v2154
    %2199 = vst.msk [vmem:[#allocation2 + $0x28] sm:$0xff] %vm2193, %v2156
    %2200 = vst.msk [vmem:[#allocation2 + $0x30] sm:$0xff] %vm2193, %v2158
    %2201 = vst.msk [vmem:[#allocation2 + $0x38] sm:$0xff] %vm2193, %v2160
    %2202 = vst.msk [vmem:[#allocation2 + $0x40] sm:$0xff] %vm2193, %v2162
    %2203 = vst.msk [vmem:[#allocation2 + $0x48] sm:$0xff] %vm2193, %v2164
    %2204 = vst.msk [vmem:[#allocation2 + $0x50] sm:$0xff] %vm2193, %v2166
    %2205 = vst.msk [vmem:[#allocation2 + $0x58] sm:$0xff] %vm2193, %v2168
    %2206 = vst.msk [vmem:[#allocation2 + $0x60] sm:$0xff] %vm2193, %v2170
    %2207 = vst.msk [vmem:[#allocation2 + $0x68] sm:$0xff] %vm2193, %v2172
    %2208 = vst.msk [vmem:[#allocation2 + $0x70] sm:$0xff] %vm2193, %v2174
    %2209 = vst.msk [vmem:[#allocation2 + $0x78] sm:$0xff] %vm2193, %v2176
    // Predicated region
    $region14: #{tpu_custom_call.1} parent=1 // pred_check
      _
    $region15: #{tpu_custom_call.1} parent=1 // pred_check_branch
      %2211 = sbr.rel (0) target = $region17
    $region16: #{tpu_custom_call.1} parent=1 // pred_region
      %s2213 = ssub.s32 2048, 2048
      %2214 = vsyncadd [#allocation3], %s2213
      %s2215 = sshll.u32 [#allocation2], 4
      %s2216 = int_to_ptr.vmem [resolvable:$true] %s2215
      %2221 = dma.vmem_to_hbm [thread:$0]  %s2216, 2048, %s3, [#allocation3], 128, 128, 8
    $region17: #{tpu_custom_call.1} parent=1 // pred_fallthru
      _
    // Predicated region
    $region18: #{tpu_custom_call.1} parent=1 // pred_check
      _
    $region19: #{tpu_custom_call.1} parent=1 // pred_check_branch
      %2223 = sbr.rel (0) target = $region21
    $region20: #{tpu_custom_call.1} parent=1 // pred_region
      %2224 = dma.done [#allocation3], 2048
    $region21: #{tpu_custom_call.1} parent=1 // pred_fallthru
      _
    %2225 = vsyncpa [#allocation3], 1

</llo_original>
